<compile_context>
chip_gen: v5e
topology: v5e:2x2
jax: 0.10.0
libtpu: 0.0.40
codegen_flags: <defaults>
</compile_context>

<pallas_src>
import jax
import jax.numpy as jnp
from jax.experimental import pallas as pl
from jax.experimental.pallas import tpu as pltpu


def _round_up(x, m):
    return (x + m - 1) // m * m


def _choose_frames_per_block(nf, hw, ckp, cmid, feat_dim,
                             budget_bytes=24 * 1024 * 1024):
    """Pick frames-per-block F: largest divisor of nf that fits the VMEM budget
    while keeping >= 2 grid steps (so v7x's second TensorCore has work)."""
    def vmem_bytes(f):
        patches_b = 2 * f * hw * ckp * 2                    # double-buffered bf16 input
        weights_b = 2 * (ckp * cmid + cmid * feat_dim) * 2  # bf16 weights, 2 bufs
        inter_b = f * hw * (cmid + feat_dim) * 4            # f32 intermediates
        out_b = 2 * f * feat_dim * 4                        # f32 output block, 2 bufs
        return patches_b + weights_b + inter_b + out_b

    best = 1
    for f in range(1, nf + 1):
        if nf % f:
            continue
        if vmem_bytes(f) > budget_bytes:
            continue
        if nf // f >= 2 or nf == 1:
            best = f
    return best


def _make_trunk_kernel(last_pool):
    """Per-block trunk: 3x3 conv (matmul on im2col patches) -> ReLU ->
    1x1 conv -> ReLU -> global average pool -> fused MaxPool1d epilogue.
    fc == Identity, inference-mode Dropout == identity."""

    def kernel(patches_ref, w1_ref, b1_ref, w2_ref, b2_ref, out_ref):
        f, hw, ckp = patches_ref.shape
        x = patches_ref[...].reshape(f * hw, ckp)            # bf16 (F*HW, CKP)
        # conv as MXU matmul, f32 accumulation.
        h = jnp.dot(x, w1_ref[...], preferred_element_type=jnp.float32)
        h = jnp.maximum(h + b1_ref[...], 0.0)
        y = jnp.dot(h.astype(jnp.bfloat16), w2_ref[...],
                    preferred_element_type=jnp.float32)
        y = jnp.maximum(y + b2_ref[...], 0.0)                # (F*HW, FEAT)
        # ResNet global average pool over spatial positions.
        feat = jnp.mean(y.reshape(f, hw, -1), axis=1)        # (F, FEAT)
        # Fused nn.MaxPool1d(last_pool) (identity when last_pool == 1).
        if last_pool > 1:
            fd = feat.shape[-1]
            feat = jnp.max(feat.reshape(f, fd // last_pool, last_pool), axis=-1)
        out_ref[0] = feat                                    # (F, OUT)

    return kernel


def backbone_forward(x, params, last_pool):
    """x: (B, n_samples, n_segs, C, H, W) float32 (NCHW frames, as in torch)."""
    w1, b1, w2, b2 = params
    B, S, G, C, H, W = x.shape
    nf = B * S * G
    hw = H * W
    ck = C * 9
    cmid = w1.shape[1]
    feat_dim = w2.shape[1]
    assert feat_dim % last_pool == 0, (feat_dim, last_pool)
    out_dim = feat_dim // last_pool if last_pool > 1 else feat_dim

    # x.reshape((-1,) + x.size()[-3:]): collapse (batch, samples, segs) -> frames.
    frames = x.reshape(nf, C, H, W)
    # 3x3 im2col (pad=1) directly in channels-last layout: (nf, H, W, C*9).
    # TODO(synk): at large H*W, generate im2col in-kernel from raw frames to
    # avoid the 9x HBM read amplification of materialized patches.
    patches = jax.lax.conv_general_dilated_patches(
        frames, filter_shape=(3, 3), window_strides=(1, 1), padding="SAME",
        dimension_numbers=("NCHW", "HWIO", "NHWC"))
    patches = patches.reshape(nf, hw, ck)

    # Lane-dense contraction axis: pad CK up to a multiple of 128 with zeros
    # (matching zero rows in w1 keep the math identical), bf16 MXU operands.
    ckp = _round_up(ck, 128)
    if ckp != ck:
        patches = jnp.pad(patches, ((0, 0), (0, 0), (0, ckp - ck)))
        w1 = jnp.pad(w1, ((0, ckp - ck), (0, 0)))
    patches = patches.astype(jnp.bfloat16)
    w1 = w1.astype(jnp.bfloat16)
    w2 = w2.astype(jnp.bfloat16)
    b1 = b1.astype(jnp.float32).reshape(1, cmid)
    b2 = b2.astype(jnp.float32).reshape(1, feat_dim)

    # Batch frames per grid step to fill the MXU M dimension and amortize the
    # ~0.35us/step pipeline overhead; budget sized for v7x's smaller VMEM.
    f = _choose_frames_per_block(nf, hw, ckp, cmid, feat_dim)
    nblocks = nf // f

    feats = pl.pallas_call(
        _make_trunk_kernel(last_pool),
        out_shape=jax.ShapeDtypeStruct((nblocks, f, out_dim), jnp.float32),
        grid=(nblocks,),
        in_specs=[
            pl.BlockSpec((f, hw, ckp), lambda i: (i, 0, 0)),
            pl.BlockSpec((ckp, cmid), lambda i: (0, 0)),
            pl.BlockSpec((1, cmid), lambda i: (0, 0)),
            pl.BlockSpec((cmid, feat_dim), lambda i: (0, 0)),
            pl.BlockSpec((1, feat_dim), lambda i: (0, 0)),
        ],
        out_specs=pl.BlockSpec((1, f, out_dim), lambda i: (i, 0, 0)),
        compiler_params=pltpu.CompilerParams(
            dimension_semantics=("parallel",),
            vmem_limit_bytes=40 * 1024 * 1024,
        ),
    )(patches, w1, b1, w2, b2)

    # dropout_last: inference-mode nn.Dropout is identity.
    # TODO(synk): training-mode dropout RNG stream of torch is not reproduced.

    # x.view((-1, n_samples, n_segs, feat_dim))
    return feats.reshape(B, S, G, out_dim)


def _reference(x, params, last_pool):
    """Pure-JAX reference with the same bf16-operand / f32-accumulate math."""
    w1, b1, w2, b2 = params
    B, S, G, C, H, W = x.shape
    nf = B * S * G
    frames = x.reshape(nf, C, H, W)
    patches = jax.lax.conv_general_dilated_patches(
        frames, filter_shape=(3, 3), window_strides=(1, 1), padding="SAME",
        dimension_numbers=("NCHW", "HWIO", "NHWC")).reshape(nf, H * W, C * 9)
    p = patches.astype(jnp.bfloat16).astype(jnp.float32)
    w1f = w1.astype(jnp.bfloat16).astype(jnp.float32)
    w2f = w2.astype(jnp.bfloat16).astype(jnp.float32)
    h = jnp.maximum(p @ w1f + b1.reshape(1, -1), 0.0)
    h = h.astype(jnp.bfloat16).astype(jnp.float32)
    y = jnp.maximum(h @ w2f + b2.reshape(1, -1), 0.0)
    feat = y.mean(axis=1)
    if last_pool > 1:
        feat = feat.reshape(nf, feat.shape[1] // last_pool, last_pool).max(-1)
    return feat.reshape(B, S, G, -1)


if __name__ == "__main__":
    key = jax.random.PRNGKey(0)
    B, S, G = 2, 1, 4          # batch, n_samples, n_segments
    C, H, W = 4, 8, 8          # per-frame NCHW
    CMID, FEAT = 32, 128       # trunk widths (FEAT stands in for resnet's 2048)
    LAST_POOL = 2              # param_TSM['main']['last_pool']

    k1, k2, k3, k4, kx = jax.random.split(key, 5)
    w1 = 0.1 * jax.random.normal(k1, (C * 9, CMID), jnp.float32)
    b1 = 0.1 * jax.random.normal(k2, (1, CMID), jnp.float32)
    w2 = 0.1 * jax.random.normal(k3, (CMID, FEAT), jnp.float32)
    b2 = 0.1 * jax.random.normal(k4, (1, FEAT), jnp.float32)
    x = jax.random.normal(kx, (B, S, G, C, H, W), jnp.float32)

    params = (w1, b1, w2, b2)
    out = jax.block_until_ready(backbone_forward(x, params, LAST_POOL))
    assert out.shape == (B, S, G, FEAT // LAST_POOL), out.shape

    ref = _reference(x, params, LAST_POOL)
    err = float(jnp.max(jnp.abs(out - ref)))
    assert jnp.allclose(out, ref, atol=1e-2, rtol=1e-2), err

    print("KERNEL_OK")
</pallas_src>

<mosaic_0001>
module attributes {stable_mosaic.version = 11 : i64} {
  func.func @kernel(%arg0: i32, %arg1: memref<4x64x128xbf16, #tpu.memory_space<vmem>>, %arg2: memref<128x32xbf16, #tpu.memory_space<vmem>>, %arg3: memref<1x32xf32, #tpu.memory_space<vmem>>, %arg4: memref<32x128xbf16, #tpu.memory_space<vmem>>, %arg5: memref<1x128xf32, #tpu.memory_space<vmem>>, %arg6: memref<1x4x64xf32, #tpu.memory_space<vmem>>) attributes {dimension_semantics = [#tpu.dimension_semantics<parallel>], iteration_bounds = array<i64: 2>, scalar_prefetch = 0 : i64, scratch_operands = 0 : i64, tpu.core_type = #tpu.core_type<tc>, window_params = [{transform_indices = @transform_0, window_bounds = array<i64: 4, 64, 128>}, {pipeline_mode = #tpu.pipeline_mode<synchronous>, transform_indices = @transform_1, window_bounds = array<i64: 128, 32>}, {pipeline_mode = #tpu.pipeline_mode<synchronous>, transform_indices = @transform_2, window_bounds = array<i64: 1, 32>}, {pipeline_mode = #tpu.pipeline_mode<synchronous>, transform_indices = @transform_3, window_bounds = array<i64: 32, 128>}, {pipeline_mode = #tpu.pipeline_mode<synchronous>, transform_indices = @transform_4, window_bounds = array<i64: 1, 128>}, {transform_indices = @transform_5, window_bounds = array<i64: 1, 4, 64>}]} {
    %c0 = arith.constant 0 : index
    %c0_0 = arith.constant 0 : index
    %c0_1 = arith.constant 0 : index
    %0 = vector.load %arg1[%c0, %c0_0, %c0_1] : memref<4x64x128xbf16, #tpu.memory_space<vmem>>, vector<4x64x128xbf16>
    %1 = vector.shape_cast %0 : vector<4x64x128xbf16> to vector<256x128xbf16>
    %c0_2 = arith.constant 0 : index
    %c0_3 = arith.constant 0 : index
    %2 = vector.load %arg2[%c0_2, %c0_3] : memref<128x32xbf16, #tpu.memory_space<vmem>>, vector<128x32xbf16>
    %cst = arith.constant dense<0.000000e+00> : vector<256x32xf32>
    %3 = tpu.matmul %1, %2, %cst {dimension_numbers = #tpu.dot_dimension_numbers<[1], [0], [0], [1], [0, 0, 1, 1], [], []>} : vector<256x128xbf16>, vector<128x32xbf16>, vector<256x32xf32> -> vector<256x32xf32>
    %c0_4 = arith.constant 0 : index
    %c0_5 = arith.constant 0 : index
    %4 = vector.load %arg3[%c0_4, %c0_5] : memref<1x32xf32, #tpu.memory_space<vmem>>, vector<1x32xf32>
    %5 = vector.broadcast %4 : vector<1x32xf32> to vector<256x32xf32>
    %6 = arith.addf %3, %5 : vector<256x32xf32>
    %cst_6 = arith.constant 0.000000e+00 : f32
    %7 = vector.broadcast %cst_6 : f32 to vector<256x32xf32>
    %8 = arith.maximumf %6, %7 : vector<256x32xf32>
    %9 = arith.truncf %8 : vector<256x32xf32> to vector<256x32xbf16>
    %c0_7 = arith.constant 0 : index
    %c0_8 = arith.constant 0 : index
    %10 = vector.load %arg4[%c0_7, %c0_8] : memref<32x128xbf16, #tpu.memory_space<vmem>>, vector<32x128xbf16>
    %cst_9 = arith.constant dense<0.000000e+00> : vector<256x128xf32>
    %11 = tpu.matmul %9, %10, %cst_9 {dimension_numbers = #tpu.dot_dimension_numbers<[1], [0], [0], [1], [0, 0, 1, 1], [], []>} : vector<256x32xbf16>, vector<32x128xbf16>, vector<256x128xf32> -> vector<256x128xf32>
    %c0_10 = arith.constant 0 : index
    %c0_11 = arith.constant 0 : index
    %12 = vector.load %arg5[%c0_10, %c0_11] : memref<1x128xf32, #tpu.memory_space<vmem>>, vector<1x128xf32>
    %13 = vector.broadcast %12 : vector<1x128xf32> to vector<256x128xf32>
    %14 = arith.addf %11, %13 : vector<256x128xf32>
    %cst_12 = arith.constant 0.000000e+00 : f32
    %15 = vector.broadcast %cst_12 : f32 to vector<256x128xf32>
    %16 = arith.maximumf %14, %15 : vector<256x128xf32>
    %17 = vector.shape_cast %16 : vector<256x128xf32> to vector<4x64x128xf32>
    %cst_13 = arith.constant dense<0.000000e+00> : vector<4x128xf32>
    %18 = vector.multi_reduction <add>, %17, %cst_13 [1] : vector<4x64x128xf32> to vector<4x128xf32>
    %cst_14 = arith.constant 6.400000e+01 : f32
    %19 = vector.broadcast %cst_14 : f32 to vector<4x128xf32>
    %20 = arith.divf %18, %19 : vector<4x128xf32>
    %21 = vector.shape_cast %20 : vector<4x128xf32> to vector<4x64x2xf32>
    %cst_15 = arith.constant dense<0xFF800000> : vector<4x64xf32>
    %22 = vector.multi_reduction <maximumf>, %21, %cst_15 [2] : vector<4x64x2xf32> to vector<4x64xf32>
    %c0_16 = arith.constant 0 : index
    %c0_17 = arith.constant 0 : index
    %c0_18 = arith.constant 0 : index
    %23 = vector.load %arg6[%c0_16, %c0_17, %c0_18] : memref<1x4x64xf32, #tpu.memory_space<vmem>>, vector<1x4x64xf32>
    %24 = vector.shape_cast %23 : vector<1x4x64xf32> to vector<4x64xf32>
    %25 = vector.shape_cast %22 : vector<4x64xf32> to vector<1x4x64xf32>
    tpu.vector_store %arg6[%c0_16, %c0_17, %c0_18], %25 {strides = array<i32>} : memref<1x4x64xf32, #tpu.memory_space<vmem>>, vector<1x4x64xf32>,
    return
  }
  func.func @transform_0(%arg0: i32) -> (i32, i32, i32) {
    %c0_i32 = arith.constant 0 : i32
    %c0_i32_0 = arith.constant 0 : i32
    %c0_i32_1 = arith.constant 0 : i32
    return %arg0, %c0_i32, %c0_i32_0 : i32, i32, i32
  }
  func.func @transform_1(%arg0: i32) -> (i32, i32) {
    %c0_i32 = arith.constant 0 : i32
    %c0_i32_0 = arith.constant 0 : i32
    %c0_i32_1 = arith.constant 0 : i32
    return %c0_i32, %c0_i32_0 : i32, i32
  }
  func.func @transform_2(%arg0: i32) -> (i32, i32) {
    %c0_i32 = arith.constant 0 : i32
    %c0_i32_0 = arith.constant 0 : i32
    %c0_i32_1 = arith.constant 0 : i32
    return %c0_i32, %c0_i32_0 : i32, i32
  }
  func.func @transform_3(%arg0: i32) -> (i32, i32) {
    %c0_i32 = arith.constant 0 : i32
    %c0_i32_0 = arith.constant 0 : i32
    %c0_i32_1 = arith.constant 0 : i32
    return %c0_i32, %c0_i32_0 : i32, i32
  }
  func.func @transform_4(%arg0: i32) -> (i32, i32) {
    %c0_i32 = arith.constant 0 : i32
    %c0_i32_0 = arith.constant 0 : i32
    %c0_i32_1 = arith.constant 0 : i32
    return %c0_i32, %c0_i32_0 : i32, i32
  }
  func.func @transform_5(%arg0: i32) -> (i32, i32, i32) {
    %c0_i32 = arith.constant 0 : i32
    %c0_i32_0 = arith.constant 0 : i32
    %c0_i32_1 = arith.constant 0 : i32
    return %arg0, %c0_i32, %c0_i32_0 : i32, i32, i32
  }
}

</mosaic_0001>

<llo_original>
// kernel: tpu_custom_call.1
$region0: #{tpu_custom_call.1}
  #allocation0 [shape = 'u32[]', space=smem, size = 0x4, offset = 0x4, fixed_abs, tag = 'smem constant byte address 0x4 - core index']
  #allocation1 [shape = 'u32[72,128]{1,0:T(1,128)}', space=vmem, size = 0x9000, scoped, tag = 'internal scratch']
  %s0 = inlined_call_operand.hbm [shape: bf16[8,64,128], index: 0, kind: input, shape index: {}]
  %s1 = inlined_call_operand.vmem [shape: bf16[128,32], index: 1, kind: input, shape index: {}]
  %s2 = inlined_call_operand.vmem [shape: f32[1,32], index: 2, kind: input, shape index: {}]
  %s3 = inlined_call_operand.vmem [shape: bf16[32,128], index: 3, kind: input, shape index: {}]
  %s4 = inlined_call_operand.vmem [shape: f32[1,128], index: 4, kind: input, shape index: {}]
  %s5 = inlined_call_operand.hbm [shape: f32[2,4,64], index: 5, kind: output, shape index: {}]
  %s6 = sld [smem:[#allocation0]]
  $region57: #{tpu_custom_call.1} parent=0
    _
  %s8 = ssub.s32 1, %s6
  %s9 = scalar_select 0, %s8, %s6
  $region1: #{tpu_custom_call.1} parent=0
    #allocation2 [shape = 'u8[131072]{0}', space=vmem, size = 0x20000, scoped, tag = 'input window, operand 0']
    #allocation3 [shape = 's32[2]{0}', space=sflag, size = 0x8, scoped, tag = 'scoped memory for tpu_custom_call.1']
    #allocation4 [shape = 's32[2]{0}', space=sflag, size = 0x8, scoped, tag = 'scoped memory for tpu_custom_call.1']
    #allocation5 [shape = 'u8[4096]{0}', space=vmem, size = 0x1000, scoped, tag = 'output window, operand 0']
    %10 = vsyncpa [#allocation3], 0
    %s11 = scalar_lea.sflag [#allocation3], 1
    %12 = vsyncpa %s11, 0
    %13 = vsyncpa [#allocation4], 0
    %s14 = scalar_lea.sflag [#allocation4], 1
    %15 = vsyncpa %s14, 0
    loop: start=0, step=1, limit=4
    $region2: #{tpu_custom_call.1} parent=1 // loop_pre_header
      _
    $region3: #{tpu_custom_call.1} parent=1 // loop_header
      %s17 = sphi 0, %s21
      %p18 = scmp.ge.s32.totalorder %s17, 4
      %s27 = sphi 0, %s29
      %s30 = sphi 0, %s27
      %s31 = sphi 0, %s30
      %s47 = sphi 0, %s31
      %s51 = sphi 0, %s51
      %s53 = sphi 0, %s51
      %s54 = sphi 0, %s53
      %s68 = sphi 0, %s54
      %s72 = sphi 0, %s72
      %s74 = sphi 0, %s72
      %s75 = sphi 0, %s74
      %s89 = sphi 0, %s75
      %s93 = sphi 0, %s93
      %s95 = sphi 0, %s93
      %s96 = sphi 0, %s95
      %s110 = sphi 0, %s96
      %s114 = sphi 0, %s114
      %s116 = sphi 0, %s114
      %s117 = sphi 0, %s116
      %s131 = sphi 0, %s117
      %s137 = sphi 0, %s139
      %s140 = sphi 0, %s137
      %s141 = sphi 0, %s140
      %s157 = sphi 0, %s141
    $region4: #{tpu_custom_call.1} parent=1 // loop_header_branch
      %20 = sbr.rel (%p18) target = $region8
    $region5: #{tpu_custom_call.1} parent=1 // loop_body
      %s22 = ssub.s32 %s17, 1
      %s23 = ssub.s32 %s17, 2
      %s24 = sadd.s32 %s17, 1
      %s25 = ssub.s32 %s17, %s24
      %p26 = scmp.eq.s32.totalorder %s25, 0
      %s28 = sadd.s32 %s27, 1
      %s29 = scalar_select %p26, %s27, %s28
      %p32 = pneg %p26
      %p33 = scmp.eq.s32.totalorder %s17, 1
      %p34 = por %p32, %p33
      %p35 = scmp.ne.s32.totalorder %s27, %s30
      %p36 = scmp.eq.s32.totalorder %s17, 0
      %p37 = por %p35, %p36
      %p38 = scmp.ne.s32.totalorder %s27, %s30
      %p39 = scmp.eq.s32.totalorder %s22, 1
      %p40 = por %p38, %p39
      %p41 = scmp.ne.s32.totalorder %s30, %s31
      %p42 = scmp.eq.s32.totalorder %s22, 0
      %p43 = por %p41, %p42
      %p44 = scmp.ne.s32.totalorder %s30, %s31
      %p45 = scmp.eq.s32.totalorder %s23, 1
      %p46 = por %p44, %p45
      %p48 = scmp.ne.s32.totalorder %s31, %s47
      %p49 = scmp.eq.s32.totalorder %s23, 0
      %p50 = por %p48, %p49
      %s52 = sadd.s32 %s51, 1
      %p55 = scmp.eq.s32.totalorder %s17, 1
      %p56 = scmp.ne.s32.totalorder %s51, %s53
      %p57 = scmp.eq.s32.totalorder %s17, 0
      %p58 = por %p56, %p57
      %p59 = scmp.ne.s32.totalorder %s51, %s53
      %p60 = scmp.eq.s32.totalorder %s22, 1
      %p61 = por %p59, %p60
      %p62 = scmp.ne.s32.totalorder %s53, %s54
      %p63 = scmp.eq.s32.totalorder %s22, 0
      %p64 = por %p62, %p63
      %p65 = scmp.ne.s32.totalorder %s53, %s54
      %p66 = scmp.eq.s32.totalorder %s23, 1
      %p67 = por %p65, %p66
      %p69 = scmp.ne.s32.totalorder %s54, %s68
      %p70 = scmp.eq.s32.totalorder %s23, 0
      %p71 = por %p69, %p70
      %s73 = sadd.s32 %s72, 1
      %p76 = scmp.eq.s32.totalorder %s17, 1
      %p77 = scmp.ne.s32.totalorder %s72, %s74
      %p78 = scmp.eq.s32.totalorder %s17, 0
      %p79 = por %p77, %p78
      %p80 = scmp.ne.s32.totalorder %s72, %s74
      %p81 = scmp.eq.s32.totalorder %s22, 1
      %p82 = por %p80, %p81
      %p83 = scmp.ne.s32.totalorder %s74, %s75
      %p84 = scmp.eq.s32.totalorder %s22, 0
      %p85 = por %p83, %p84
      %p86 = scmp.ne.s32.totalorder %s74, %s75
      %p87 = scmp.eq.s32.totalorder %s23, 1
      %p88 = por %p86, %p87
      %p90 = scmp.ne.s32.totalorder %s75, %s89
      %p91 = scmp.eq.s32.totalorder %s23, 0
      %p92 = por %p90, %p91
      %s94 = sadd.s32 %s93, 1
      %p97 = scmp.eq.s32.totalorder %s17, 1
      %p98 = scmp.ne.s32.totalorder %s93, %s95
      %p99 = scmp.eq.s32.totalorder %s17, 0
      %p100 = por %p98, %p99
      %p101 = scmp.ne.s32.totalorder %s93, %s95
      %p102 = scmp.eq.s32.totalorder %s22, 1
      %p103 = por %p101, %p102
      %p104 = scmp.ne.s32.totalorder %s95, %s96
      %p105 = scmp.eq.s32.totalorder %s22, 0
      %p106 = por %p104, %p105
      %p107 = scmp.ne.s32.totalorder %s95, %s96
      %p108 = scmp.eq.s32.totalorder %s23, 1
      %p109 = por %p107, %p108
      %p111 = scmp.ne.s32.totalorder %s96, %s110
      %p112 = scmp.eq.s32.totalorder %s23, 0
      %p113 = por %p111, %p112
      %s115 = sadd.s32 %s114, 1
      %p118 = scmp.eq.s32.totalorder %s17, 1
      %p119 = scmp.ne.s32.totalorder %s114, %s116
      %p120 = scmp.eq.s32.totalorder %s17, 0
      %p121 = por %p119, %p120
      %p122 = scmp.ne.s32.totalorder %s114, %s116
      %p123 = scmp.eq.s32.totalorder %s22, 1
      %p124 = por %p122, %p123
      %p125 = scmp.ne.s32.totalorder %s116, %s117
      %p126 = scmp.eq.s32.totalorder %s22, 0
      %p127 = por %p125, %p126
      %p128 = scmp.ne.s32.totalorder %s116, %s117
      %p129 = scmp.eq.s32.totalorder %s23, 1
      %p130 = por %p128, %p129
      %p132 = scmp.ne.s32.totalorder %s117, %s131
      %p133 = scmp.eq.s32.totalorder %s23, 0
      %p134 = por %p132, %p133
      %s135 = ssub.s32 %s17, %s24
      %p136 = scmp.eq.s32.totalorder %s135, 0
      %s138 = sadd.s32 %s137, 1
      %s139 = scalar_select %p136, %s137, %s138
      %p142 = pneg %p136
      %p143 = scmp.eq.s32.totalorder %s17, 1
      %p144 = por %p142, %p143
      %p145 = scmp.ne.s32.totalorder %s137, %s140
      %p146 = scmp.eq.s32.totalorder %s17, 0
      %p147 = por %p145, %p146
      %p148 = scmp.ne.s32.totalorder %s137, %s140
      %p149 = scmp.eq.s32.totalorder %s22, 1
      %p150 = por %p148, %p149
      %p151 = scmp.ne.s32.totalorder %s140, %s141
      %p152 = scmp.eq.s32.totalorder %s22, 0
      %p153 = por %p151, %p152
      %p154 = scmp.ne.s32.totalorder %s140, %s141
      %p155 = scmp.eq.s32.totalorder %s23, 1
      %p156 = por %p154, %p155
      %p158 = scmp.ne.s32.totalorder %s141, %s157
      %p159 = scmp.eq.s32.totalorder %s23, 0
      %p160 = por %p158, %p159
      %p161 = scmp.le.s32.totalorder 1, %s17
      %p162 = scmp.lt.s32.totalorder %s17, 3
      %p163 = pnand %p161, %p162
      %p164 = pneg %p163
      // Predicated region
      $region9: #{tpu_custom_call.1} parent=5 // pred_check
        _
      $region10: #{tpu_custom_call.1} parent=5 // pred_check_branch
        %166 = sbr.rel (%p163) target = $region12
      $region11: #{tpu_custom_call.1} parent=5 // pred_region
        %s167 = ssub.s32 %s17, 1
        // Predicated region
        $region13: #{tpu_custom_call.1} parent=11 // pred_check
          %p168 = pneg %p64
        $region14: #{tpu_custom_call.1} parent=11 // pred_check_branch
          %170 = sbr.rel (%p168) target = $region16
        $region15: #{tpu_custom_call.1} parent=11 // pred_region
          _
        $region16: #{tpu_custom_call.1} parent=11 // pred_fallthru
          _
        // Predicated region
        $region17: #{tpu_custom_call.1} parent=11 // pred_check
          %p171 = pneg %p85
        $region18: #{tpu_custom_call.1} parent=11 // pred_check_branch
          %173 = sbr.rel (%p171) target = $region20
        $region19: #{tpu_custom_call.1} parent=11 // pred_region
          _
        $region20: #{tpu_custom_call.1} parent=11 // pred_fallthru
          _
        // Predicated region
        $region21: #{tpu_custom_call.1} parent=11 // pred_check
          %p174 = pneg %p106
        $region22: #{tpu_custom_call.1} parent=11 // pred_check_branch
          %176 = sbr.rel (%p174) target = $region24
        $region23: #{tpu_custom_call.1} parent=11 // pred_region
          _
        $region24: #{tpu_custom_call.1} parent=11 // pred_fallthru
          _
        // Predicated region
        $region25: #{tpu_custom_call.1} parent=11 // pred_check
          %p177 = pneg %p127
        $region26: #{tpu_custom_call.1} parent=11 // pred_check_branch
          %179 = sbr.rel (%p177) target = $region28
        $region27: #{tpu_custom_call.1} parent=11 // pred_region
          _
        $region28: #{tpu_custom_call.1} parent=11 // pred_fallthru
          _
      $region12: #{tpu_custom_call.1} parent=5 // pred_fallthru
        _
      %p180 = scmp.lt.s32.totalorder %s17, 2
      // Predicated region
      $region29: #{tpu_custom_call.1} parent=5 // pred_check
        %p181 = pneg %p180
      $region30: #{tpu_custom_call.1} parent=5 // pred_check_branch
        %183 = sbr.rel (%p181) target = $region32
      $region31: #{tpu_custom_call.1} parent=5 // pred_region
        // Predicated region
        $region33: #{tpu_custom_call.1} parent=31 // pred_check
          %p184 = pneg %p37
        $region34: #{tpu_custom_call.1} parent=31 // pred_check_branch
          %186 = sbr.rel (%p184) target = $region36
        $region35: #{tpu_custom_call.1} parent=31 // pred_region
          %s187 = sand.u32 %s27, 1
          %s188 = scalar_lea.sflag [#allocation3], %s187
          %s189 = sand.u32 %s27, 1
          %s190 = smul.addr %s189, 128
          %s191 = scalar_lea.vmem [#allocation2], %s190
          %s192 = smul.u32 4, %s17
          %194 = vsyncadd %s188, 0
          %s195 = smul.addr %s192, 8
          %s196 = smul.addr %s195, 4
          %s197 = scalar_lea.hbm %s0, %s196
          %s198 = sshll.u32 %s197, 4
          %s199 = int_to_ptr.hbm [resolvable:$true] %s198
          %s200 = sshll.u32 %s191, 4
          %s201 = int_to_ptr.vmem [resolvable:$true] %s200
          %206 = dma.hbm_to_vmem [thread:$0]  %s199, 2048, %s201, %s188, 64, 64, 4
        $region36: #{tpu_custom_call.1} parent=31 // pred_fallthru
          _
      $region32: #{tpu_custom_call.1} parent=5 // pred_fallthru
        _
      %p207 = scmp.le.s32.totalorder 1, %s17
      %p208 = scmp.lt.s32.totalorder %s17, 3
      %p209 = pnand %p207, %p208
      %p210 = pneg %p209
      // Predicated region
      $region37: #{tpu_custom_call.1} parent=5 // pred_check
        _
      $region38: #{tpu_custom_call.1} parent=5 // pred_check_branch
        %212 = sbr.rel (%p209) target = $region40
      $region39: #{tpu_custom_call.1} parent=5 // pred_region
        %s213 = ssub.s32 %s17, 1
        %s214 = sand.u32 %s30, 1
        %s215 = scalar_lea.sflag [#allocation3], %s214
        %s216 = sand.u32 %s30, 1
        %s217 = smul.addr %s216, 128
        %s218 = scalar_lea.vmem [#allocation2], %s217
        // Predicated region
        $region41: #{tpu_custom_call.1} parent=39 // pred_check
          %p219 = pneg %p43
        $region42: #{tpu_custom_call.1} parent=39 // pred_check_branch
          %221 = sbr.rel (%p219) target = $region44
        $region43: #{tpu_custom_call.1} parent=39 // pred_region
          %223 = dma.done %s215, 2048
        $region44: #{tpu_custom_call.1} parent=39 // pred_fallthru
          _
        %s224 = sand.u32 %s30, 1
        %s225 = scalar_lea.sflag [#allocation3], %s224
        %s226 = sand.u32 %s30, 1
        %s227 = smul.addr %s226, 128
        %s228 = scalar_lea.vmem [#allocation2], %s227
        %p229 = pneg %p43
        %p230 = pneg %p40
        %p231 = pneg %p64
        %p232 = pneg %p61
        %p233 = pneg %p85
        %p234 = pneg %p82
        %p235 = pneg %p106
        %p236 = pneg %p103
        %p237 = pneg %p127
        %p238 = pneg %p124
        %p239 = pneg %p153
        %p240 = pneg %p150
        %s241 = sand.u32 %s140, 1
        %s242 = scalar_lea.sflag [#allocation4], %s241
        %s243 = sand.u32 %s140, 1
        %s244 = smul.addr %s243, 4
        %s245 = scalar_lea.vmem [#allocation5], %s244
        %s246 = smul.u32 4, %s22
        %v248 = vld [vmem:[%s218] sm:$0xf]
        %v249 = vld [vmem:[%s218 + $0x4] sm:$0xf]
        %v250 = vld [vmem:[%s218 + $0x8] sm:$0xf]
        %v251 = vld [vmem:[%s218 + $0xc] sm:$0xf]
        %v252 = vld [vmem:[%s218 + $0x10] sm:$0xf]
        %v253 = vld [vmem:[%s218 + $0x14] sm:$0xf]
        %v254 = vld [vmem:[%s218 + $0x18] sm:$0xf]
        %v255 = vld [vmem:[%s218 + $0x1c] sm:$0xf]
        %v256 = vld [vmem:[%s218 + $0x20] sm:$0xf]
        %v257 = vld [vmem:[%s218 + $0x24] sm:$0xf]
        %v258 = vld [vmem:[%s218 + $0x28] sm:$0xf]
        %v259 = vld [vmem:[%s218 + $0x2c] sm:$0xf]
        %v260 = vld [vmem:[%s218 + $0x30] sm:$0xf]
        %v261 = vld [vmem:[%s218 + $0x34] sm:$0xf]
        %v262 = vld [vmem:[%s218 + $0x38] sm:$0xf]
        %v263 = vld [vmem:[%s218 + $0x3c] sm:$0xf]
        %v264 = vld [vmem:[%s218 + $0x40] sm:$0xf]
        %v265 = vld [vmem:[%s218 + $0x44] sm:$0xf]
        %v266 = vld [vmem:[%s218 + $0x48] sm:$0xf]
        %v267 = vld [vmem:[%s218 + $0x4c] sm:$0xf]
        %v268 = vld [vmem:[%s218 + $0x50] sm:$0xf]
        %v269 = vld [vmem:[%s218 + $0x54] sm:$0xf]
        %v270 = vld [vmem:[%s218 + $0x58] sm:$0xf]
        %v271 = vld [vmem:[%s218 + $0x5c] sm:$0xf]
        %v272 = vld [vmem:[%s218 + $0x60] sm:$0xf]
        %v273 = vld [vmem:[%s218 + $0x64] sm:$0xf]
        %v274 = vld [vmem:[%s218 + $0x68] sm:$0xf]
        %v275 = vld [vmem:[%s218 + $0x6c] sm:$0xf]
        %v276 = vld [vmem:[%s218 + $0x70] sm:$0xf]
        %v277 = vld [vmem:[%s218 + $0x74] sm:$0xf]
        %v278 = vld [vmem:[%s218 + $0x78] sm:$0xf]
        %v279 = vld [vmem:[%s218 + $0x7c] sm:$0xf]
        %v280 = vld [vmem:[%s1] sm:$0xf]
        %v281 = vld [vmem:[%s1 + $0x4] sm:$0xf]
        %v282 = vld [vmem:[%s1 + $0x8] sm:$0xf]
        %v283 = vld [vmem:[%s1 + $0xc] sm:$0xf]
        %v284 = vld [vmem:[%s1 + $0x10] sm:$0xf]
        %v285 = vld [vmem:[%s1 + $0x14] sm:$0xf]
        %v286 = vld [vmem:[%s1 + $0x18] sm:$0xf]
        %v287 = vld [vmem:[%s1 + $0x1c] sm:$0xf]
        %v288 = vld [vmem:[%s1 + $0x20] sm:$0xf]
        %v289 = vld [vmem:[%s1 + $0x24] sm:$0xf]
        %v290 = vld [vmem:[%s1 + $0x28] sm:$0xf]
        %v291 = vld [vmem:[%s1 + $0x2c] sm:$0xf]
        %v292 = vld [vmem:[%s1 + $0x30] sm:$0xf]
        %v293 = vld [vmem:[%s1 + $0x34] sm:$0xf]
        %v294 = vld [vmem:[%s1 + $0x38] sm:$0xf]
        %v295 = vld [vmem:[%s1 + $0x3c] sm:$0xf]
        %v296 = vld [vmem:[%s2] sm:$0x1]
        %v298 = vperm.slane %v296, 0
        %v332 = vunpack.c.l.b16 %v248
        %v333 = vunpack.c.l.b16 %v249
        %v334 = vunpack.c.l.b16 %v250
        %v335 = vunpack.c.l.b16 %v251
        %v336 = vunpack.c.l.b16 %v252
        %v337 = vunpack.c.l.b16 %v253
        %v338 = vunpack.c.l.b16 %v254
        %v339 = vunpack.c.l.b16 %v255
        %v340 = vunpack.c.l.b16 %v256
        %v341 = vunpack.c.l.b16 %v257
        %v342 = vunpack.c.l.b16 %v258
        %v343 = vunpack.c.l.b16 %v259
        %v344 = vunpack.c.l.b16 %v260
        %v345 = vunpack.c.l.b16 %v261
        %v346 = vunpack.c.l.b16 %v262
        %v347 = vunpack.c.l.b16 %v263
        %v348 = vunpack.c.l.b16 %v264
        %v349 = vunpack.c.l.b16 %v265
        %v350 = vunpack.c.l.b16 %v266
        %v351 = vunpack.c.l.b16 %v267
        %v352 = vunpack.c.l.b16 %v268
        %v353 = vunpack.c.l.b16 %v269
        %v354 = vunpack.c.l.b16 %v270
        %v355 = vunpack.c.l.b16 %v271
        %v356 = vunpack.c.l.b16 %v272
        %v357 = vunpack.c.l.b16 %v273
        %v358 = vunpack.c.l.b16 %v274
        %v359 = vunpack.c.l.b16 %v275
        %v360 = vunpack.c.l.b16 %v276
        %v361 = vunpack.c.l.b16 %v277
        %v362 = vunpack.c.l.b16 %v278
        %v363 = vunpack.c.l.b16 %v279
        %v364 = vpack.c.b16 %v333, %v332
        %v365 = vpack.c.b16 %v335, %v334
        %v366 = vpack.c.b16 %v337, %v336
        %v367 = vpack.c.b16 %v339, %v338
        %v368 = vpack.c.b16 %v341, %v340
        %v369 = vpack.c.b16 %v343, %v342
        %v370 = vpack.c.b16 %v345, %v344
        %v371 = vpack.c.b16 %v347, %v346
        %v372 = vpack.c.b16 %v349, %v348
        %v373 = vpack.c.b16 %v351, %v350
        %v374 = vpack.c.b16 %v353, %v352
        %v375 = vpack.c.b16 %v355, %v354
        %v376 = vpack.c.b16 %v357, %v356
        %v377 = vpack.c.b16 %v359, %v358
        %v378 = vpack.c.b16 %v361, %v360
        %v379 = vpack.c.b16 %v363, %v362
        %v412 = vunpack.c.l.b16 %v280
        %v413 = vunpack.c.l.b16 %v281
        %v414 = vunpack.c.l.b16 %v282
        %v415 = vunpack.c.l.b16 %v283
        %v416 = vunpack.c.l.b16 %v284
        %v417 = vunpack.c.l.b16 %v285
        %v418 = vunpack.c.l.b16 %v286
        %v419 = vunpack.c.l.b16 %v287
        %v420 = vunpack.c.l.b16 %v288
        %v421 = vunpack.c.l.b16 %v289
        %v422 = vunpack.c.l.b16 %v290
        %v423 = vunpack.c.l.b16 %v291
        %v424 = vunpack.c.l.b16 %v292
        %v425 = vunpack.c.l.b16 %v293
        %v426 = vunpack.c.l.b16 %v294
        %v427 = vunpack.c.l.b16 %v295
        %v428 = vpack.c.b16 %v413, %v412
        %v429 = vpack.c.b16 %v415, %v414
        %v430 = vpack.c.b16 %v417, %v416
        %v431 = vpack.c.b16 %v419, %v418
        %v432 = vpack.c.b16 %v421, %v420
        %v433 = vpack.c.b16 %v423, %v422
        %v434 = vpack.c.b16 %v425, %v424
        %v435 = vpack.c.b16 %v427, %v426
        %444 = vmatpush.bf16.msra.mxu0 %v435
        %445 = vmatpush.bf16.msra.mxu0 %v434
        %446 = vmatpush.bf16.msra.mxu0 %v433
        %447 = vmatpush.bf16.msra.mxu0 %v432
        %448 = vmatpush.bf16.msra.mxu0 %v431
        %449 = vmatpush.bf16.msra.mxu0 %v430
        %450 = vmatpush.bf16.msra.mxu0 %v429
        %451 = vmatpush.bf16.msra.mxu0 %v428
        %452 = vmatmul.bf16.gmra.mxu0 %v364
        %v453 = vpop.f32.mrf.mxu0
        %v454 = vadd.f32 %v298, %v453
        %v455 = vpop.f32.mrf.mxu0
        %v456 = vadd.f32 %v298, %v455
        %457 = vmatmul.bf16.gmra.mxu0 %v365
        %v458 = vpop.f32.mrf.mxu0
        %v459 = vadd.f32 %v298, %v458
        %v460 = vpop.f32.mrf.mxu0
        %v461 = vadd.f32 %v298, %v460
        %462 = vmatmul.bf16.gmra.mxu0 %v366
        %v463 = vpop.f32.mrf.mxu0
        %v464 = vadd.f32 %v298, %v463
        %v465 = vpop.f32.mrf.mxu0
        %v466 = vadd.f32 %v298, %v465
        %467 = vmatmul.bf16.gmra.mxu0 %v367
        %v468 = vpop.f32.mrf.mxu0
        %v469 = vadd.f32 %v298, %v468
        %v470 = vpop.f32.mrf.mxu0
        %v471 = vadd.f32 %v298, %v470
        %472 = vmatmul.bf16.gmra.mxu0 %v368
        %v473 = vpop.f32.mrf.mxu0
        %v474 = vadd.f32 %v298, %v473
        %v475 = vpop.f32.mrf.mxu0
        %v476 = vadd.f32 %v298, %v475
        %477 = vmatmul.bf16.gmra.mxu0 %v369
        %v478 = vpop.f32.mrf.mxu0
        %v479 = vadd.f32 %v298, %v478
        %v480 = vpop.f32.mrf.mxu0
        %v481 = vadd.f32 %v298, %v480
        %482 = vmatmul.bf16.gmra.mxu0 %v370
        %v483 = vpop.f32.mrf.mxu0
        %v484 = vadd.f32 %v298, %v483
        %v485 = vpop.f32.mrf.mxu0
        %v486 = vadd.f32 %v298, %v485
        %487 = vmatmul.bf16.gmra.mxu0 %v371
        %v488 = vpop.f32.mrf.mxu0
        %v489 = vadd.f32 %v298, %v488
        %v490 = vpop.f32.mrf.mxu0
        %v491 = vadd.f32 %v298, %v490
        %492 = vmatmul.bf16.gmra.mxu0 %v372
        %v493 = vpop.f32.mrf.mxu0
        %v494 = vadd.f32 %v298, %v493
        %v495 = vpop.f32.mrf.mxu0
        %v496 = vadd.f32 %v298, %v495
        %497 = vmatmul.bf16.gmra.mxu0 %v373
        %v498 = vpop.f32.mrf.mxu0
        %v499 = vadd.f32 %v298, %v498
        %v500 = vpop.f32.mrf.mxu0
        %v501 = vadd.f32 %v298, %v500
        %502 = vmatmul.bf16.gmra.mxu0 %v374
        %v503 = vpop.f32.mrf.mxu0
        %v504 = vadd.f32 %v298, %v503
        %v505 = vpop.f32.mrf.mxu0
        %v506 = vadd.f32 %v298, %v505
        %507 = vmatmul.bf16.gmra.mxu0 %v375
        %v508 = vpop.f32.mrf.mxu0
        %v509 = vadd.f32 %v298, %v508
        %v510 = vpop.f32.mrf.mxu0
        %v511 = vadd.f32 %v298, %v510
        %512 = vmatmul.bf16.gmra.mxu0 %v376
        %v513 = vpop.f32.mrf.mxu0
        %v514 = vadd.f32 %v298, %v513
        %v515 = vpop.f32.mrf.mxu0
        %v516 = vadd.f32 %v298, %v515
        %517 = vmatmul.bf16.gmra.mxu0 %v377
        %v518 = vpop.f32.mrf.mxu0
        %v519 = vadd.f32 %v298, %v518
        %v520 = vpop.f32.mrf.mxu0
        %v521 = vadd.f32 %v298, %v520
        %522 = vmatmul.bf16.gmra.mxu0 %v378
        %v523 = vpop.f32.mrf.mxu0
        %v524 = vadd.f32 %v298, %v523
        %v525 = vpop.f32.mrf.mxu0
        %v526 = vadd.f32 %v298, %v525
        %527 = vmatmul.bf16.gmra.mxu0 %v379
        %v528 = vpop.f32.mrf.mxu0
        %v529 = vadd.f32 %v298, %v528
        %v530 = vpop.f32.mrf.mxu0
        %v531 = vadd.f32 %v298, %v530
        %532 = vdwg.mxu0
        %v533 = vmax.f32 %v454, 0.0
        %v534 = vmax.f32 %v456, 0.0
        %v535 = vmax.f32 %v459, 0.0
        %v536 = vmax.f32 %v461, 0.0
        %v537 = vmax.f32 %v464, 0.0
        %v538 = vmax.f32 %v466, 0.0
        %v539 = vmax.f32 %v469, 0.0
        %v540 = vmax.f32 %v471, 0.0
        %v541 = vmax.f32 %v474, 0.0
        %v542 = vmax.f32 %v476, 0.0
        %v543 = vmax.f32 %v479, 0.0
        %v544 = vmax.f32 %v481, 0.0
        %v545 = vmax.f32 %v484, 0.0
        %v546 = vmax.f32 %v486, 0.0
        %v547 = vmax.f32 %v489, 0.0
        %v548 = vmax.f32 %v491, 0.0
        %v549 = vmax.f32 %v494, 0.0
        %v550 = vmax.f32 %v496, 0.0
        %v551 = vmax.f32 %v499, 0.0
        %v552 = vmax.f32 %v501, 0.0
        %v553 = vmax.f32 %v504, 0.0
        %v554 = vmax.f32 %v506, 0.0
        %v555 = vmax.f32 %v509, 0.0
        %v556 = vmax.f32 %v511, 0.0
        %v557 = vmax.f32 %v514, 0.0
        %v558 = vmax.f32 %v516, 0.0
        %v559 = vmax.f32 %v519, 0.0
        %v560 = vmax.f32 %v521, 0.0
        %v561 = vmax.f32 %v524, 0.0
        %v562 = vmax.f32 %v526, 0.0
        %v563 = vmax.f32 %v529, 0.0
        %v564 = vmax.f32 %v531, 0.0
        %v565 = vpack.c.bf16 %v534, %v533
        %v566 = vpack.c.bf16 %v536, %v535
        %v567 = vpack.c.bf16 %v538, %v537
        %v568 = vpack.c.bf16 %v540, %v539
        %v569 = vpack.c.bf16 %v542, %v541
        %v570 = vpack.c.bf16 %v544, %v543
        %v571 = vpack.c.bf16 %v546, %v545
        %v572 = vpack.c.bf16 %v548, %v547
        %v573 = vpack.c.bf16 %v550, %v549
        %v574 = vpack.c.bf16 %v552, %v551
        %v575 = vpack.c.bf16 %v554, %v553
        %v576 = vpack.c.bf16 %v556, %v555
        %v577 = vpack.c.bf16 %v558, %v557
        %v578 = vpack.c.bf16 %v560, %v559
        %v579 = vpack.c.bf16 %v562, %v561
        %v580 = vpack.c.bf16 %v564, %v563
        %v581 = vld [vmem:[%s3] sm:$0xf]
        %v582 = vld [vmem:[%s3 + $0x4] sm:$0xf]
        %v583 = vld [vmem:[%s3 + $0x8] sm:$0xf]
        %v584 = vld [vmem:[%s3 + $0xc] sm:$0xf]
        %v585 = vld [vmem:[%s4] sm:$0x1]
        %v587 = vperm.slane %v585, 0
        %v593 = vunpack.c.l.b16 %v581
        %v594 = vunpack.c.l.b16 %v582
        %v595 = vunpack.c.l.b16 %v583
        %v596 = vunpack.c.l.b16 %v584
        %v597 = vpack.c.b16 %v594, %v593
        %v598 = vpack.c.b16 %v596, %v595
        %vm601 = vcmask 261120
        %v603 = vsel %vm601, %v565, 0
        %v606 = vsel %vm601, %v566, 0
        %v609 = vsel %vm601, %v567, 0
        %v612 = vsel %vm601, %v568, 0
        %v615 = vsel %vm601, %v569, 0
        %v618 = vsel %vm601, %v570, 0
        %v621 = vsel %vm601, %v571, 0
        %v624 = vsel %vm601, %v572, 0
        %v627 = vsel %vm601, %v573, 0
        %v630 = vsel %vm601, %v574, 0
        %v633 = vsel %vm601, %v575, 0
        %v636 = vsel %vm601, %v576, 0
        %v639 = vsel %vm601, %v577, 0
        %v642 = vsel %vm601, %v578, 0
        %v645 = vsel %vm601, %v579, 0
        %v648 = vsel %vm601, %v580, 0
        %650 = vmatpush.bf16.msra.mxu0 0
        %651 = vmatpush.bf16.msra.mxu0 0
        %652 = vmatpush.bf16.msra.mxu0 0
        %653 = vmatpush.bf16.msra.mxu0 0
        %654 = vmatpush.bf16.msra.mxu0 0
        %655 = vmatpush.bf16.msra.mxu0 0
        %656 = vmatpush.bf16.msra.mxu0 %v598
        %657 = vmatpush.bf16.msra.mxu0 %v597
        %658 = vmatmul.bf16.gmra.mxu0 %v603
        %v659 = vpop.f32.mrf.mxu0
        %v660 = vadd.f32 %v587, %v659
        %v661 = vpop.f32.mrf.mxu0
        %v662 = vadd.f32 %v587, %v661
        %663 = vmatmul.bf16.gmra.mxu0 %v606
        %v664 = vpop.f32.mrf.mxu0
        %v665 = vadd.f32 %v587, %v664
        %v666 = vpop.f32.mrf.mxu0
        %v667 = vadd.f32 %v587, %v666
        %668 = vmatmul.bf16.gmra.mxu0 %v609
        %v669 = vpop.f32.mrf.mxu0
        %v670 = vadd.f32 %v587, %v669
        %v671 = vpop.f32.mrf.mxu0
        %v672 = vadd.f32 %v587, %v671
        %673 = vmatmul.bf16.gmra.mxu0 %v612
        %v674 = vpop.f32.mrf.mxu0
        %v675 = vadd.f32 %v587, %v674
        %v676 = vpop.f32.mrf.mxu0
        %v677 = vadd.f32 %v587, %v676
        %678 = vmatmul.bf16.gmra.mxu0 %v615
        %v679 = vpop.f32.mrf.mxu0
        %v680 = vadd.f32 %v587, %v679
        %v681 = vpop.f32.mrf.mxu0
        %v682 = vadd.f32 %v587, %v681
        %683 = vmatmul.bf16.gmra.mxu0 %v618
        %v684 = vpop.f32.mrf.mxu0
        %v685 = vadd.f32 %v587, %v684
        %v686 = vpop.f32.mrf.mxu0
        %v687 = vadd.f32 %v587, %v686
        %688 = vmatmul.bf16.gmra.mxu0 %v621
        %v689 = vpop.f32.mrf.mxu0
        %v690 = vadd.f32 %v587, %v689
        %v691 = vpop.f32.mrf.mxu0
        %v692 = vadd.f32 %v587, %v691
        %693 = vmatmul.bf16.gmra.mxu0 %v624
        %v694 = vpop.f32.mrf.mxu0
        %v695 = vadd.f32 %v587, %v694
        %v696 = vpop.f32.mrf.mxu0
        %v697 = vadd.f32 %v587, %v696
        %698 = vmatmul.bf16.gmra.mxu0 %v627
        %v699 = vpop.f32.mrf.mxu0
        %v700 = vadd.f32 %v587, %v699
        %v701 = vpop.f32.mrf.mxu0
        %v702 = vadd.f32 %v587, %v701
        %703 = vmatmul.bf16.gmra.mxu0 %v630
        %v704 = vpop.f32.mrf.mxu0
        %v705 = vadd.f32 %v587, %v704
        %v706 = vpop.f32.mrf.mxu0
        %v707 = vadd.f32 %v587, %v706
        %708 = vmatmul.bf16.gmra.mxu0 %v633
        %v709 = vpop.f32.mrf.mxu0
        %v710 = vadd.f32 %v587, %v709
        %v711 = vpop.f32.mrf.mxu0
        %v712 = vadd.f32 %v587, %v711
        %713 = vmatmul.bf16.gmra.mxu0 %v636
        %v714 = vpop.f32.mrf.mxu0
        %v715 = vadd.f32 %v587, %v714
        %v716 = vpop.f32.mrf.mxu0
        %v717 = vadd.f32 %v587, %v716
        %718 = vmatmul.bf16.gmra.mxu0 %v639
        %v719 = vpop.f32.mrf.mxu0
        %v720 = vadd.f32 %v587, %v719
        %v721 = vpop.f32.mrf.mxu0
        %v722 = vadd.f32 %v587, %v721
        %723 = vmatmul.bf16.gmra.mxu0 %v642
        %v724 = vpop.f32.mrf.mxu0
        %v725 = vadd.f32 %v587, %v724
        %v726 = vpop.f32.mrf.mxu0
        %v727 = vadd.f32 %v587, %v726
        %728 = vmatmul.bf16.gmra.mxu0 %v645
        %v729 = vpop.f32.mrf.mxu0
        %v730 = vadd.f32 %v587, %v729
        %v731 = vpop.f32.mrf.mxu0
        %v732 = vadd.f32 %v587, %v731
        %733 = vmatmul.bf16.gmra.mxu0 %v648
        %v734 = vpop.f32.mrf.mxu0
        %v735 = vadd.f32 %v587, %v734
        %v736 = vpop.f32.mrf.mxu0
        %v737 = vadd.f32 %v587, %v736
        %738 = vdwg.mxu0
        %v739 = vmax.f32 %v660, 0.0
        %v740 = vmax.f32 %v662, 0.0
        %v741 = vmax.f32 %v665, 0.0
        %v742 = vmax.f32 %v667, 0.0
        %v743 = vmax.f32 %v670, 0.0
        %v744 = vmax.f32 %v672, 0.0
        %v745 = vmax.f32 %v675, 0.0
        %v746 = vmax.f32 %v677, 0.0
        %v747 = vmax.f32 %v680, 0.0
        %v748 = vmax.f32 %v682, 0.0
        %v749 = vmax.f32 %v685, 0.0
        %v750 = vmax.f32 %v687, 0.0
        %v751 = vmax.f32 %v690, 0.0
        %v752 = vmax.f32 %v692, 0.0
        %v753 = vmax.f32 %v695, 0.0
        %v754 = vmax.f32 %v697, 0.0
        %v755 = vmax.f32 %v700, 0.0
        %v756 = vmax.f32 %v702, 0.0
        %v757 = vmax.f32 %v705, 0.0
        %v758 = vmax.f32 %v707, 0.0
        %v759 = vmax.f32 %v710, 0.0
        %v760 = vmax.f32 %v712, 0.0
        %v761 = vmax.f32 %v715, 0.0
        %v762 = vmax.f32 %v717, 0.0
        %v763 = vmax.f32 %v720, 0.0
        %v764 = vmax.f32 %v722, 0.0
        %v765 = vmax.f32 %v725, 0.0
        %v766 = vmax.f32 %v727, 0.0
        %v767 = vmax.f32 %v730, 0.0
        %v768 = vmax.f32 %v732, 0.0
        %v769 = vmax.f32 %v735, 0.0
        %v770 = vmax.f32 %v737, 0.0
        %v771 = vadd.f32 %v739, %v740
        %v772 = vadd.f32 %v771, %v741
        %v773 = vadd.f32 %v772, %v742
        %v774 = vadd.f32 %v773, %v743
        %v775 = vadd.f32 %v774, %v744
        %v776 = vadd.f32 %v775, %v745
        %v777 = vadd.f32 %v776, %v746
        %v778 = vrot.slane %v777, 4
        %v779 = vadd.f32 %v777, %v778
        %v780 = vrot.slane %v779, 2
        %v781 = vadd.f32 %v779, %v780
        %v782 = vrot.slane %v781, 1
        %v783 = vadd.f32 %v781, %v782
        %v784 = vadd.f32 %v747, %v748
        %v785 = vadd.f32 %v784, %v749
        %v786 = vadd.f32 %v785, %v750
        %v787 = vadd.f32 %v786, %v751
        %v788 = vadd.f32 %v787, %v752
        %v789 = vadd.f32 %v788, %v753
        %v790 = vadd.f32 %v789, %v754
        %v791 = vrot.slane %v790, 4
        %v792 = vadd.f32 %v790, %v791
        %v793 = vrot.slane %v792, 2
        %v794 = vadd.f32 %v792, %v793
        %v795 = vrot.slane %v794, 1
        %v796 = vadd.f32 %v794, %v795
        %v797 = vadd.f32 %v755, %v756
        %v798 = vadd.f32 %v797, %v757
        %v799 = vadd.f32 %v798, %v758
        %v800 = vadd.f32 %v799, %v759
        %v801 = vadd.f32 %v800, %v760
        %v802 = vadd.f32 %v801, %v761
        %v803 = vadd.f32 %v802, %v762
        %v804 = vrot.slane %v803, 4
        %v805 = vadd.f32 %v803, %v804
        %v806 = vrot.slane %v805, 2
        %v807 = vadd.f32 %v805, %v806
        %v808 = vrot.slane %v807, 1
        %v809 = vadd.f32 %v807, %v808
        %v810 = vadd.f32 %v763, %v764
        %v811 = vadd.f32 %v810, %v765
        %v812 = vadd.f32 %v811, %v766
        %v813 = vadd.f32 %v812, %v767
        %v814 = vadd.f32 %v813, %v768
        %v815 = vadd.f32 %v814, %v769
        %v816 = vadd.f32 %v815, %v770
        %v817 = vrot.slane %v816, 4
        %v818 = vadd.f32 %v816, %v817
        %v819 = vrot.slane %v818, 2
        %v820 = vadd.f32 %v818, %v819
        %v821 = vrot.slane %v820, 1
        %v822 = vadd.f32 %v820, %v821
        %v823 = vrcp.pop 64.0
        %v824 = vmul.f32 64.0, %v823
        %v825 = vsub.f32 1.0, %v824
        %v826 = vmul.f32 %v823, %v825
        %v827 = vadd.f32 %v823, %v826
        %vm828 = vweird.f32 %v823
        %v829 = vsel %vm828, %v823, %v827
        %v830 = vmul.f32 %v783, %v829
        %v831 = vmul.f32 %v796, %v829
        %v832 = vmul.f32 %v809, %v829
        %v833 = vmul.f32 %v822, %v829
        %838 = vrot.lane.b32.xlu0 %v830, 126
        %v839 = vpop.permute.xlu0 %838
        %840 = vrot.lane.b32.xlu0 %v831, 126
        %v841 = vpop.permute.xlu0 %840
        %842 = vrot.lane.b32.xlu0 %v832, 126
        %v843 = vpop.permute.xlu0 %842
        %844 = vrot.lane.b32.xlu0 %v833, 126
        %v845 = vpop.permute.xlu0 %844
        %846 = vrot.lane.b32.xlu0 %v830, 124
        %v847 = vpop.permute.xlu0 %846
        %848 = vrot.lane.b32.xlu0 %v831, 124
        %v849 = vpop.permute.xlu0 %848
        %850 = vrot.lane.b32.xlu0 %v832, 124
        %v851 = vpop.permute.xlu0 %850
        %852 = vrot.lane.b32.xlu0 %v833, 124
        %v853 = vpop.permute.xlu0 %852
        %854 = vrot.lane.b32.xlu0 %v830, 122
        %v855 = vpop.permute.xlu0 %854
        %856 = vrot.lane.b32.xlu0 %v831, 122
        %v857 = vpop.permute.xlu0 %856
        %858 = vrot.lane.b32.xlu0 %v832, 122
        %v859 = vpop.permute.xlu0 %858
        %860 = vrot.lane.b32.xlu0 %v833, 122
        %v861 = vpop.permute.xlu0 %860
        %862 = vrot.lane.b32.xlu0 %v830, 120
        %v863 = vpop.permute.xlu0 %862
        %864 = vrot.lane.b32.xlu0 %v831, 120
        %v865 = vpop.permute.xlu0 %864
        %866 = vrot.lane.b32.xlu0 %v832, 120
        %v867 = vpop.permute.xlu0 %866
        %868 = vrot.lane.b32.xlu0 %v833, 120
        %v869 = vpop.permute.xlu0 %868
        %870 = vrot.lane.b32.xlu0 %v830, 118
        %v871 = vpop.permute.xlu0 %870
        %872 = vrot.lane.b32.xlu0 %v831, 118
        %v873 = vpop.permute.xlu0 %872
        %874 = vrot.lane.b32.xlu0 %v832, 118
        %v875 = vpop.permute.xlu0 %874
        %876 = vrot.lane.b32.xlu0 %v833, 118
        %v877 = vpop.permute.xlu0 %876
        %878 = vrot.lane.b32.xlu0 %v830, 116
        %v879 = vpop.permute.xlu0 %878
        %880 = vrot.lane.b32.xlu0 %v831, 116
        %v881 = vpop.permute.xlu0 %880
        %882 = vrot.lane.b32.xlu0 %v832, 116
        %v883 = vpop.permute.xlu0 %882
        %884 = vrot.lane.b32.xlu0 %v833, 116
        %v885 = vpop.permute.xlu0 %884
        %886 = vrot.lane.b32.xlu0 %v830, 114
        %v887 = vpop.permute.xlu0 %886
        %888 = vrot.lane.b32.xlu0 %v831, 114
        %v889 = vpop.permute.xlu0 %888
        %890 = vrot.lane.b32.xlu0 %v832, 114
        %v891 = vpop.permute.xlu0 %890
        %892 = vrot.lane.b32.xlu0 %v833, 114
        %v893 = vpop.permute.xlu0 %892
        %894 = vrot.lane.b32.xlu0 %v830, 112
        %v895 = vpop.permute.xlu0 %894
        %896 = vrot.lane.b32.xlu0 %v831, 112
        %v897 = vpop.permute.xlu0 %896
        %898 = vrot.lane.b32.xlu0 %v832, 112
        %v899 = vpop.permute.xlu0 %898
        %900 = vrot.lane.b32.xlu0 %v833, 112
        %v901 = vpop.permute.xlu0 %900
        %902 = vrot.lane.b32.xlu0 %v830, 110
        %v903 = vpop.permute.xlu0 %902
        %904 = vrot.lane.b32.xlu0 %v831, 110
        %v905 = vpop.permute.xlu0 %904
        %906 = vrot.lane.b32.xlu0 %v832, 110
        %v907 = vpop.permute.xlu0 %906
        %908 = vrot.lane.b32.xlu0 %v833, 110
        %v909 = vpop.permute.xlu0 %908
        %910 = vrot.lane.b32.xlu0 %v830, 108
        %v911 = vpop.permute.xlu0 %910
        %912 = vrot.lane.b32.xlu0 %v831, 108
        %v913 = vpop.permute.xlu0 %912
        %914 = vrot.lane.b32.xlu0 %v832, 108
        %v915 = vpop.permute.xlu0 %914
        %916 = vrot.lane.b32.xlu0 %v833, 108
        %v917 = vpop.permute.xlu0 %916
        %918 = vrot.lane.b32.xlu0 %v830, 106
        %v919 = vpop.permute.xlu0 %918
        %920 = vrot.lane.b32.xlu0 %v831, 106
        %v921 = vpop.permute.xlu0 %920
        %922 = vrot.lane.b32.xlu0 %v832, 106
        %v923 = vpop.permute.xlu0 %922
        %924 = vrot.lane.b32.xlu0 %v833, 106
        %v925 = vpop.permute.xlu0 %924
        %926 = vrot.lane.b32.xlu0 %v830, 104
        %v927 = vpop.permute.xlu0 %926
        %928 = vrot.lane.b32.xlu0 %v831, 104
        %v929 = vpop.permute.xlu0 %928
        %930 = vrot.lane.b32.xlu0 %v832, 104
        %v931 = vpop.permute.xlu0 %930
        %932 = vrot.lane.b32.xlu0 %v833, 104
        %v933 = vpop.permute.xlu0 %932
        %934 = vrot.lane.b32.xlu0 %v830, 102
        %v935 = vpop.permute.xlu0 %934
        %936 = vrot.lane.b32.xlu0 %v831, 102
        %v937 = vpop.permute.xlu0 %936
        %938 = vrot.lane.b32.xlu0 %v832, 102
        %v939 = vpop.permute.xlu0 %938
        %940 = vrot.lane.b32.xlu0 %v833, 102
        %v941 = vpop.permute.xlu0 %940
        %942 = vrot.lane.b32.xlu0 %v830, 100
        %v943 = vpop.permute.xlu0 %942
        %944 = vrot.lane.b32.xlu0 %v831, 100
        %v945 = vpop.permute.xlu0 %944
        %946 = vrot.lane.b32.xlu0 %v832, 100
        %v947 = vpop.permute.xlu0 %946
        %948 = vrot.lane.b32.xlu0 %v833, 100
        %v949 = vpop.permute.xlu0 %948
        %950 = vrot.lane.b32.xlu0 %v830, 98
        %v951 = vpop.permute.xlu0 %950
        %952 = vrot.lane.b32.xlu0 %v831, 98
        %v953 = vpop.permute.xlu0 %952
        %954 = vrot.lane.b32.xlu0 %v832, 98
        %v955 = vpop.permute.xlu0 %954
        %956 = vrot.lane.b32.xlu0 %v833, 98
        %v957 = vpop.permute.xlu0 %956
        %958 = vrot.lane.b32.xlu0 %v830, 96
        %v959 = vpop.permute.xlu0 %958
        %960 = vrot.lane.b32.xlu0 %v831, 96
        %v961 = vpop.permute.xlu0 %960
        %962 = vrot.lane.b32.xlu0 %v832, 96
        %v963 = vpop.permute.xlu0 %962
        %964 = vrot.lane.b32.xlu0 %v833, 96
        %v965 = vpop.permute.xlu0 %964
        %966 = vrot.lane.b32.xlu0 %v830, 94
        %v967 = vpop.permute.xlu0 %966
        %968 = vrot.lane.b32.xlu0 %v831, 94
        %v969 = vpop.permute.xlu0 %968
        %970 = vrot.lane.b32.xlu0 %v832, 94
        %v971 = vpop.permute.xlu0 %970
        %972 = vrot.lane.b32.xlu0 %v833, 94
        %v973 = vpop.permute.xlu0 %972
        %974 = vrot.lane.b32.xlu0 %v830, 92
        %v975 = vpop.permute.xlu0 %974
        %976 = vrot.lane.b32.xlu0 %v831, 92
        %v977 = vpop.permute.xlu0 %976
        %978 = vrot.lane.b32.xlu0 %v832, 92
        %v979 = vpop.permute.xlu0 %978
        %980 = vrot.lane.b32.xlu0 %v833, 92
        %v981 = vpop.permute.xlu0 %980
        %982 = vrot.lane.b32.xlu0 %v830, 90
        %v983 = vpop.permute.xlu0 %982
        %984 = vrot.lane.b32.xlu0 %v831, 90
        %v985 = vpop.permute.xlu0 %984
        %986 = vrot.lane.b32.xlu0 %v832, 90
        %v987 = vpop.permute.xlu0 %986
        %988 = vrot.lane.b32.xlu0 %v833, 90
        %v989 = vpop.permute.xlu0 %988
        %990 = vrot.lane.b32.xlu0 %v830, 88
        %v991 = vpop.permute.xlu0 %990
        %992 = vrot.lane.b32.xlu0 %v831, 88
        %v993 = vpop.permute.xlu0 %992
        %994 = vrot.lane.b32.xlu0 %v832, 88
        %v995 = vpop.permute.xlu0 %994
        %996 = vrot.lane.b32.xlu0 %v833, 88
        %v997 = vpop.permute.xlu0 %996
        %998 = vrot.lane.b32.xlu0 %v830, 86
        %v999 = vpop.permute.xlu0 %998
        %1000 = vrot.lane.b32.xlu0 %v831, 86
        %v1001 = vpop.permute.xlu0 %1000
        %1002 = vrot.lane.b32.xlu0 %v832, 86
        %v1003 = vpop.permute.xlu0 %1002
        %1004 = vrot.lane.b32.xlu0 %v833, 86
        %v1005 = vpop.permute.xlu0 %1004
        %1006 = vrot.lane.b32.xlu0 %v830, 84
        %v1007 = vpop.permute.xlu0 %1006
        %1008 = vrot.lane.b32.xlu0 %v831, 84
        %v1009 = vpop.permute.xlu0 %1008
        %1010 = vrot.lane.b32.xlu0 %v832, 84
        %v1011 = vpop.permute.xlu0 %1010
        %1012 = vrot.lane.b32.xlu0 %v833, 84
        %v1013 = vpop.permute.xlu0 %1012
        %1014 = vrot.lane.b32.xlu0 %v830, 82
        %v1015 = vpop.permute.xlu0 %1014
        %1016 = vrot.lane.b32.xlu0 %v831, 82
        %v1017 = vpop.permute.xlu0 %1016
        %1018 = vrot.lane.b32.xlu0 %v832, 82
        %v1019 = vpop.permute.xlu0 %1018
        %1020 = vrot.lane.b32.xlu0 %v833, 82
        %v1021 = vpop.permute.xlu0 %1020
        %1022 = vrot.lane.b32.xlu0 %v830, 80
        %v1023 = vpop.permute.xlu0 %1022
        %1024 = vrot.lane.b32.xlu0 %v831, 80
        %v1025 = vpop.permute.xlu0 %1024
        %1026 = vrot.lane.b32.xlu0 %v832, 80
        %v1027 = vpop.permute.xlu0 %1026
        %1028 = vrot.lane.b32.xlu0 %v833, 80
        %v1029 = vpop.permute.xlu0 %1028
        %1030 = vrot.lane.b32.xlu0 %v830, 78
        %v1031 = vpop.permute.xlu0 %1030
        %1032 = vrot.lane.b32.xlu0 %v831, 78
        %v1033 = vpop.permute.xlu0 %1032
        %1034 = vrot.lane.b32.xlu0 %v832, 78
        %v1035 = vpop.permute.xlu0 %1034
        %1036 = vrot.lane.b32.xlu0 %v833, 78
        %v1037 = vpop.permute.xlu0 %1036
        %1038 = vrot.lane.b32.xlu0 %v830, 76
        %v1039 = vpop.permute.xlu0 %1038
        %1040 = vrot.lane.b32.xlu0 %v831, 76
        %v1041 = vpop.permute.xlu0 %1040
        %1042 = vrot.lane.b32.xlu0 %v832, 76
        %v1043 = vpop.permute.xlu0 %1042
        %1044 = vrot.lane.b32.xlu0 %v833, 76
        %v1045 = vpop.permute.xlu0 %1044
        %1046 = vrot.lane.b32.xlu0 %v830, 74
        %v1047 = vpop.permute.xlu0 %1046
        %1048 = vrot.lane.b32.xlu0 %v831, 74
        %v1049 = vpop.permute.xlu0 %1048
        %1050 = vrot.lane.b32.xlu0 %v832, 74
        %v1051 = vpop.permute.xlu0 %1050
        %1052 = vrot.lane.b32.xlu0 %v833, 74
        %v1053 = vpop.permute.xlu0 %1052
        %1054 = vrot.lane.b32.xlu0 %v830, 72
        %v1055 = vpop.permute.xlu0 %1054
        %1056 = vrot.lane.b32.xlu0 %v831, 72
        %v1057 = vpop.permute.xlu0 %1056
        %1058 = vrot.lane.b32.xlu0 %v832, 72
        %v1059 = vpop.permute.xlu0 %1058
        %1060 = vrot.lane.b32.xlu0 %v833, 72
        %v1061 = vpop.permute.xlu0 %1060
        %1062 = vrot.lane.b32.xlu0 %v830, 70
        %v1063 = vpop.permute.xlu0 %1062
        %1064 = vrot.lane.b32.xlu0 %v831, 70
        %v1065 = vpop.permute.xlu0 %1064
        %1066 = vrot.lane.b32.xlu0 %v832, 70
        %v1067 = vpop.permute.xlu0 %1066
        %1068 = vrot.lane.b32.xlu0 %v833, 70
        %v1069 = vpop.permute.xlu0 %1068
        %1070 = vrot.lane.b32.xlu0 %v830, 68
        %v1071 = vpop.permute.xlu0 %1070
        %1072 = vrot.lane.b32.xlu0 %v831, 68
        %v1073 = vpop.permute.xlu0 %1072
        %1074 = vrot.lane.b32.xlu0 %v832, 68
        %v1075 = vpop.permute.xlu0 %1074
        %1076 = vrot.lane.b32.xlu0 %v833, 68
        %v1077 = vpop.permute.xlu0 %1076
        %1078 = vrot.lane.b32.xlu0 %v830, 66
        %v1079 = vpop.permute.xlu0 %1078
        %1080 = vrot.lane.b32.xlu0 %v831, 66
        %v1081 = vpop.permute.xlu0 %1080
        %1082 = vrot.lane.b32.xlu0 %v832, 66
        %v1083 = vpop.permute.xlu0 %1082
        %1084 = vrot.lane.b32.xlu0 %v833, 66
        %v1085 = vpop.permute.xlu0 %1084
        %1086 = vrot.lane.b32.xlu0 %v830, 64
        %v1087 = vpop.permute.xlu0 %1086
        %1088 = vrot.lane.b32.xlu0 %v831, 64
        %v1089 = vpop.permute.xlu0 %1088
        %1090 = vrot.lane.b32.xlu0 %v832, 64
        %v1091 = vpop.permute.xlu0 %1090
        %1092 = vrot.lane.b32.xlu0 %v833, 64
        %v1093 = vpop.permute.xlu0 %1092
        %1094 = vrot.lane.b32.xlu0 %v830, 62
        %v1095 = vpop.permute.xlu0 %1094
        %1096 = vrot.lane.b32.xlu0 %v831, 62
        %v1097 = vpop.permute.xlu0 %1096
        %1098 = vrot.lane.b32.xlu0 %v832, 62
        %v1099 = vpop.permute.xlu0 %1098
        %1100 = vrot.lane.b32.xlu0 %v833, 62
        %v1101 = vpop.permute.xlu0 %1100
        %1102 = vrot.lane.b32.xlu0 %v830, 60
        %v1103 = vpop.permute.xlu0 %1102
        %1104 = vrot.lane.b32.xlu0 %v831, 60
        %v1105 = vpop.permute.xlu0 %1104
        %1106 = vrot.lane.b32.xlu0 %v832, 60
        %v1107 = vpop.permute.xlu0 %1106
        %1108 = vrot.lane.b32.xlu0 %v833, 60
        %v1109 = vpop.permute.xlu0 %1108
        %1110 = vrot.lane.b32.xlu0 %v830, 58
        %v1111 = vpop.permute.xlu0 %1110
        %1112 = vrot.lane.b32.xlu0 %v831, 58
        %v1113 = vpop.permute.xlu0 %1112
        %1114 = vrot.lane.b32.xlu0 %v832, 58
        %v1115 = vpop.permute.xlu0 %1114
        %1116 = vrot.lane.b32.xlu0 %v833, 58
        %v1117 = vpop.permute.xlu0 %1116
        %1118 = vrot.lane.b32.xlu0 %v830, 56
        %v1119 = vpop.permute.xlu0 %1118
        %1120 = vrot.lane.b32.xlu0 %v831, 56
        %v1121 = vpop.permute.xlu0 %1120
        %1122 = vrot.lane.b32.xlu0 %v832, 56
        %v1123 = vpop.permute.xlu0 %1122
        %1124 = vrot.lane.b32.xlu0 %v833, 56
        %v1125 = vpop.permute.xlu0 %1124
        %1126 = vrot.lane.b32.xlu0 %v830, 54
        %v1127 = vpop.permute.xlu0 %1126
        %1128 = vrot.lane.b32.xlu0 %v831, 54
        %v1129 = vpop.permute.xlu0 %1128
        %1130 = vrot.lane.b32.xlu0 %v832, 54
        %v1131 = vpop.permute.xlu0 %1130
        %1132 = vrot.lane.b32.xlu0 %v833, 54
        %v1133 = vpop.permute.xlu0 %1132
        %1134 = vrot.lane.b32.xlu0 %v830, 52
        %v1135 = vpop.permute.xlu0 %1134
        %1136 = vrot.lane.b32.xlu0 %v831, 52
        %v1137 = vpop.permute.xlu0 %1136
        %1138 = vrot.lane.b32.xlu0 %v832, 52
        %v1139 = vpop.permute.xlu0 %1138
        %1140 = vrot.lane.b32.xlu0 %v833, 52
        %v1141 = vpop.permute.xlu0 %1140
        %1142 = vrot.lane.b32.xlu0 %v830, 50
        %v1143 = vpop.permute.xlu0 %1142
        %1144 = vrot.lane.b32.xlu0 %v831, 50
        %v1145 = vpop.permute.xlu0 %1144
        %1146 = vrot.lane.b32.xlu0 %v832, 50
        %v1147 = vpop.permute.xlu0 %1146
        %1148 = vrot.lane.b32.xlu0 %v833, 50
        %v1149 = vpop.permute.xlu0 %1148
        %1150 = vrot.lane.b32.xlu0 %v830, 48
        %v1151 = vpop.permute.xlu0 %1150
        %1152 = vrot.lane.b32.xlu0 %v831, 48
        %v1153 = vpop.permute.xlu0 %1152
        %1154 = vrot.lane.b32.xlu0 %v832, 48
        %v1155 = vpop.permute.xlu0 %1154
        %1156 = vrot.lane.b32.xlu0 %v833, 48
        %v1157 = vpop.permute.xlu0 %1156
        %1158 = vrot.lane.b32.xlu0 %v830, 46
        %v1159 = vpop.permute.xlu0 %1158
        %1160 = vrot.lane.b32.xlu0 %v831, 46
        %v1161 = vpop.permute.xlu0 %1160
        %1162 = vrot.lane.b32.xlu0 %v832, 46
        %v1163 = vpop.permute.xlu0 %1162
        %1164 = vrot.lane.b32.xlu0 %v833, 46
        %v1165 = vpop.permute.xlu0 %1164
        %1166 = vrot.lane.b32.xlu0 %v830, 44
        %v1167 = vpop.permute.xlu0 %1166
        %1168 = vrot.lane.b32.xlu0 %v831, 44
        %v1169 = vpop.permute.xlu0 %1168
        %1170 = vrot.lane.b32.xlu0 %v832, 44
        %v1171 = vpop.permute.xlu0 %1170
        %1172 = vrot.lane.b32.xlu0 %v833, 44
        %v1173 = vpop.permute.xlu0 %1172
        %1174 = vrot.lane.b32.xlu0 %v830, 42
        %v1175 = vpop.permute.xlu0 %1174
        %1176 = vrot.lane.b32.xlu0 %v831, 42
        %v1177 = vpop.permute.xlu0 %1176
        %1178 = vrot.lane.b32.xlu0 %v832, 42
        %v1179 = vpop.permute.xlu0 %1178
        %1180 = vrot.lane.b32.xlu0 %v833, 42
        %v1181 = vpop.permute.xlu0 %1180
        %1182 = vrot.lane.b32.xlu0 %v830, 40
        %v1183 = vpop.permute.xlu0 %1182
        %1184 = vrot.lane.b32.xlu0 %v831, 40
        %v1185 = vpop.permute.xlu0 %1184
        %1186 = vrot.lane.b32.xlu0 %v832, 40
        %v1187 = vpop.permute.xlu0 %1186
        %1188 = vrot.lane.b32.xlu0 %v833, 40
        %v1189 = vpop.permute.xlu0 %1188
        %1190 = vrot.lane.b32.xlu0 %v830, 38
        %v1191 = vpop.permute.xlu0 %1190
        %1192 = vrot.lane.b32.xlu0 %v831, 38
        %v1193 = vpop.permute.xlu0 %1192
        %1194 = vrot.lane.b32.xlu0 %v832, 38
        %v1195 = vpop.permute.xlu0 %1194
        %1196 = vrot.lane.b32.xlu0 %v833, 38
        %v1197 = vpop.permute.xlu0 %1196
        %1198 = vrot.lane.b32.xlu0 %v830, 36
        %v1199 = vpop.permute.xlu0 %1198
        %1200 = vrot.lane.b32.xlu0 %v831, 36
        %v1201 = vpop.permute.xlu0 %1200
        %1202 = vrot.lane.b32.xlu0 %v832, 36
        %v1203 = vpop.permute.xlu0 %1202
        %1204 = vrot.lane.b32.xlu0 %v833, 36
        %v1205 = vpop.permute.xlu0 %1204
        %1206 = vrot.lane.b32.xlu0 %v830, 34
        %v1207 = vpop.permute.xlu0 %1206
        %1208 = vrot.lane.b32.xlu0 %v831, 34
        %v1209 = vpop.permute.xlu0 %1208
        %1210 = vrot.lane.b32.xlu0 %v832, 34
        %v1211 = vpop.permute.xlu0 %1210
        %1212 = vrot.lane.b32.xlu0 %v833, 34
        %v1213 = vpop.permute.xlu0 %1212
        %1214 = vrot.lane.b32.xlu0 %v830, 32
        %v1215 = vpop.permute.xlu0 %1214
        %1216 = vrot.lane.b32.xlu0 %v831, 32
        %v1217 = vpop.permute.xlu0 %1216
        %1218 = vrot.lane.b32.xlu0 %v832, 32
        %v1219 = vpop.permute.xlu0 %1218
        %1220 = vrot.lane.b32.xlu0 %v833, 32
        %v1221 = vpop.permute.xlu0 %1220
        %1222 = vrot.lane.b32.xlu0 %v830, 30
        %v1223 = vpop.permute.xlu0 %1222
        %1224 = vrot.lane.b32.xlu0 %v831, 30
        %v1225 = vpop.permute.xlu0 %1224
        %1226 = vrot.lane.b32.xlu0 %v832, 30
        %v1227 = vpop.permute.xlu0 %1226
        %1228 = vrot.lane.b32.xlu0 %v833, 30
        %v1229 = vpop.permute.xlu0 %1228
        %1230 = vrot.lane.b32.xlu0 %v830, 28
        %v1231 = vpop.permute.xlu0 %1230
        %1232 = vrot.lane.b32.xlu0 %v831, 28
        %v1233 = vpop.permute.xlu0 %1232
        %1234 = vrot.lane.b32.xlu0 %v832, 28
        %v1235 = vpop.permute.xlu0 %1234
        %1236 = vrot.lane.b32.xlu0 %v833, 28
        %v1237 = vpop.permute.xlu0 %1236
        %1238 = vrot.lane.b32.xlu0 %v830, 26
        %v1239 = vpop.permute.xlu0 %1238
        %1240 = vrot.lane.b32.xlu0 %v831, 26
        %v1241 = vpop.permute.xlu0 %1240
        %1242 = vrot.lane.b32.xlu0 %v832, 26
        %v1243 = vpop.permute.xlu0 %1242
        %1244 = vrot.lane.b32.xlu0 %v833, 26
        %v1245 = vpop.permute.xlu0 %1244
        %1246 = vrot.lane.b32.xlu0 %v830, 24
        %v1247 = vpop.permute.xlu0 %1246
        %1248 = vrot.lane.b32.xlu0 %v831, 24
        %v1249 = vpop.permute.xlu0 %1248
        %1250 = vrot.lane.b32.xlu0 %v832, 24
        %v1251 = vpop.permute.xlu0 %1250
        %1252 = vrot.lane.b32.xlu0 %v833, 24
        %v1253 = vpop.permute.xlu0 %1252
        %1254 = vrot.lane.b32.xlu0 %v830, 22
        %v1255 = vpop.permute.xlu0 %1254
        %1256 = vrot.lane.b32.xlu0 %v831, 22
        %v1257 = vpop.permute.xlu0 %1256
        %1258 = vrot.lane.b32.xlu0 %v832, 22
        %v1259 = vpop.permute.xlu0 %1258
        %1260 = vrot.lane.b32.xlu0 %v833, 22
        %v1261 = vpop.permute.xlu0 %1260
        %1262 = vrot.lane.b32.xlu0 %v830, 20
        %v1263 = vpop.permute.xlu0 %1262
        %1264 = vrot.lane.b32.xlu0 %v831, 20
        %v1265 = vpop.permute.xlu0 %1264
        %1266 = vrot.lane.b32.xlu0 %v832, 20
        %v1267 = vpop.permute.xlu0 %1266
        %1268 = vrot.lane.b32.xlu0 %v833, 20
        %v1269 = vpop.permute.xlu0 %1268
        %1270 = vrot.lane.b32.xlu0 %v830, 18
        %v1271 = vpop.permute.xlu0 %1270
        %1272 = vrot.lane.b32.xlu0 %v831, 18
        %v1273 = vpop.permute.xlu0 %1272
        %1274 = vrot.lane.b32.xlu0 %v832, 18
        %v1275 = vpop.permute.xlu0 %1274
        %1276 = vrot.lane.b32.xlu0 %v833, 18
        %v1277 = vpop.permute.xlu0 %1276
        %1278 = vrot.lane.b32.xlu0 %v830, 16
        %v1279 = vpop.permute.xlu0 %1278
        %1280 = vrot.lane.b32.xlu0 %v831, 16
        %v1281 = vpop.permute.xlu0 %1280
        %1282 = vrot.lane.b32.xlu0 %v832, 16
        %v1283 = vpop.permute.xlu0 %1282
        %1284 = vrot.lane.b32.xlu0 %v833, 16
        %v1285 = vpop.permute.xlu0 %1284
        %1286 = vrot.lane.b32.xlu0 %v830, 14
        %v1287 = vpop.permute.xlu0 %1286
        %1288 = vrot.lane.b32.xlu0 %v831, 14
        %v1289 = vpop.permute.xlu0 %1288
        %1290 = vrot.lane.b32.xlu0 %v832, 14
        %v1291 = vpop.permute.xlu0 %1290
        %1292 = vrot.lane.b32.xlu0 %v833, 14
        %v1293 = vpop.permute.xlu0 %1292
        %1294 = vrot.lane.b32.xlu0 %v830, 12
        %v1295 = vpop.permute.xlu0 %1294
        %1296 = vrot.lane.b32.xlu0 %v831, 12
        %v1297 = vpop.permute.xlu0 %1296
        %1298 = vrot.lane.b32.xlu0 %v832, 12
        %v1299 = vpop.permute.xlu0 %1298
        %1300 = vrot.lane.b32.xlu0 %v833, 12
        %v1301 = vpop.permute.xlu0 %1300
        %1302 = vrot.lane.b32.xlu0 %v830, 10
        %v1303 = vpop.permute.xlu0 %1302
        %1304 = vrot.lane.b32.xlu0 %v831, 10
        %v1305 = vpop.permute.xlu0 %1304
        %1306 = vrot.lane.b32.xlu0 %v832, 10
        %v1307 = vpop.permute.xlu0 %1306
        %1308 = vrot.lane.b32.xlu0 %v833, 10
        %v1309 = vpop.permute.xlu0 %1308
        %1310 = vrot.lane.b32.xlu0 %v830, 8
        %v1311 = vpop.permute.xlu0 %1310
        %1312 = vrot.lane.b32.xlu0 %v831, 8
        %v1313 = vpop.permute.xlu0 %1312
        %1314 = vrot.lane.b32.xlu0 %v832, 8
        %v1315 = vpop.permute.xlu0 %1314
        %1316 = vrot.lane.b32.xlu0 %v833, 8
        %v1317 = vpop.permute.xlu0 %1316
        %1318 = vrot.lane.b32.xlu0 %v830, 6
        %v1319 = vpop.permute.xlu0 %1318
        %1320 = vrot.lane.b32.xlu0 %v831, 6
        %v1321 = vpop.permute.xlu0 %1320
        %1322 = vrot.lane.b32.xlu0 %v832, 6
        %v1323 = vpop.permute.xlu0 %1322
        %1324 = vrot.lane.b32.xlu0 %v833, 6
        %v1325 = vpop.permute.xlu0 %1324
        %1326 = vrot.lane.b32.xlu0 %v830, 4
        %v1327 = vpop.permute.xlu0 %1326
        %1328 = vrot.lane.b32.xlu0 %v831, 4
        %v1329 = vpop.permute.xlu0 %1328
        %1330 = vrot.lane.b32.xlu0 %v832, 4
        %v1331 = vpop.permute.xlu0 %1330
        %1332 = vrot.lane.b32.xlu0 %v833, 4
        %v1333 = vpop.permute.xlu0 %1332
        %1334 = vrot.lane.b32.xlu0 %v830, 2
        %v1335 = vpop.permute.xlu0 %1334
        %1336 = vrot.lane.b32.xlu0 %v831, 2
        %v1337 = vpop.permute.xlu0 %1336
        %1338 = vrot.lane.b32.xlu0 %v832, 2
        %v1339 = vpop.permute.xlu0 %1338
        %1340 = vrot.lane.b32.xlu0 %v833, 2
        %v1341 = vpop.permute.xlu0 %1340
        %v1342 = vrot.slane %v831, 7
        %vm1343 = vcmask 1041409
        %v1344 = vsel %vm1343, %v1342, %v830
        %v1345 = vrot.slane %v832, 6
        %vm1346 = vcmask 1042434
        %v1347 = vsel %vm1346, %v1345, %v1344
        %v1348 = vrot.slane %v833, 5
        %vm1349 = vcmask 1043459
        %v1350 = vsel %vm1349, %v1348, %v1347
        %v1351 = vrot.slane %v841, 7
        %v1352 = vsel %vm1343, %v1351, %v839
        %v1353 = vrot.slane %v843, 6
        %v1354 = vsel %vm1346, %v1353, %v1352
        %v1355 = vrot.slane %v845, 5
        %v1356 = vsel %vm1349, %v1355, %v1354
        %v1357 = vrot.slane %v849, 7
        %v1358 = vsel %vm1343, %v1357, %v847
        %v1359 = vrot.slane %v851, 6
        %v1360 = vsel %vm1346, %v1359, %v1358
        %v1361 = vrot.slane %v853, 5
        %v1362 = vsel %vm1349, %v1361, %v1360
        %v1363 = vrot.slane %v857, 7
        %v1364 = vsel %vm1343, %v1363, %v855
        %v1365 = vrot.slane %v859, 6
        %v1366 = vsel %vm1346, %v1365, %v1364
        %v1367 = vrot.slane %v861, 5
        %v1368 = vsel %vm1349, %v1367, %v1366
        %v1369 = vrot.slane %v865, 7
        %v1370 = vsel %vm1343, %v1369, %v863
        %v1371 = vrot.slane %v867, 6
        %v1372 = vsel %vm1346, %v1371, %v1370
        %v1373 = vrot.slane %v869, 5
        %v1374 = vsel %vm1349, %v1373, %v1372
        %v1375 = vrot.slane %v873, 7
        %v1376 = vsel %vm1343, %v1375, %v871
        %v1377 = vrot.slane %v875, 6
        %v1378 = vsel %vm1346, %v1377, %v1376
        %v1379 = vrot.slane %v877, 5
        %v1380 = vsel %vm1349, %v1379, %v1378
        %v1381 = vrot.slane %v881, 7
        %v1382 = vsel %vm1343, %v1381, %v879
        %v1383 = vrot.slane %v883, 6
        %v1384 = vsel %vm1346, %v1383, %v1382
        %v1385 = vrot.slane %v885, 5
        %v1386 = vsel %vm1349, %v1385, %v1384
        %v1387 = vrot.slane %v889, 7
        %v1388 = vsel %vm1343, %v1387, %v887
        %v1389 = vrot.slane %v891, 6
        %v1390 = vsel %vm1346, %v1389, %v1388
        %v1391 = vrot.slane %v893, 5
        %v1392 = vsel %vm1349, %v1391, %v1390
        %v1393 = vrot.slane %v897, 7
        %v1394 = vsel %vm1343, %v1393, %v895
        %v1395 = vrot.slane %v899, 6
        %v1396 = vsel %vm1346, %v1395, %v1394
        %v1397 = vrot.slane %v901, 5
        %v1398 = vsel %vm1349, %v1397, %v1396
        %v1399 = vrot.slane %v905, 7
        %v1400 = vsel %vm1343, %v1399, %v903
        %v1401 = vrot.slane %v907, 6
        %v1402 = vsel %vm1346, %v1401, %v1400
        %v1403 = vrot.slane %v909, 5
        %v1404 = vsel %vm1349, %v1403, %v1402
        %v1405 = vrot.slane %v913, 7
        %v1406 = vsel %vm1343, %v1405, %v911
        %v1407 = vrot.slane %v915, 6
        %v1408 = vsel %vm1346, %v1407, %v1406
        %v1409 = vrot.slane %v917, 5
        %v1410 = vsel %vm1349, %v1409, %v1408
        %v1411 = vrot.slane %v921, 7
        %v1412 = vsel %vm1343, %v1411, %v919
        %v1413 = vrot.slane %v923, 6
        %v1414 = vsel %vm1346, %v1413, %v1412
        %v1415 = vrot.slane %v925, 5
        %v1416 = vsel %vm1349, %v1415, %v1414
        %v1417 = vrot.slane %v929, 7
        %v1418 = vsel %vm1343, %v1417, %v927
        %v1419 = vrot.slane %v931, 6
        %v1420 = vsel %vm1346, %v1419, %v1418
        %v1421 = vrot.slane %v933, 5
        %v1422 = vsel %vm1349, %v1421, %v1420
        %v1423 = vrot.slane %v937, 7
        %v1424 = vsel %vm1343, %v1423, %v935
        %v1425 = vrot.slane %v939, 6
        %v1426 = vsel %vm1346, %v1425, %v1424
        %v1427 = vrot.slane %v941, 5
        %v1428 = vsel %vm1349, %v1427, %v1426
        %v1429 = vrot.slane %v945, 7
        %v1430 = vsel %vm1343, %v1429, %v943
        %v1431 = vrot.slane %v947, 6
        %v1432 = vsel %vm1346, %v1431, %v1430
        %v1433 = vrot.slane %v949, 5
        %v1434 = vsel %vm1349, %v1433, %v1432
        %v1435 = vrot.slane %v953, 7
        %v1436 = vsel %vm1343, %v1435, %v951
        %v1437 = vrot.slane %v955, 6
        %v1438 = vsel %vm1346, %v1437, %v1436
        %v1439 = vrot.slane %v957, 5
        %v1440 = vsel %vm1349, %v1439, %v1438
        %v1441 = vrot.slane %v961, 7
        %v1442 = vsel %vm1343, %v1441, %v959
        %v1443 = vrot.slane %v963, 6
        %v1444 = vsel %vm1346, %v1443, %v1442
        %v1445 = vrot.slane %v965, 5
        %v1446 = vsel %vm1349, %v1445, %v1444
        %v1447 = vrot.slane %v969, 7
        %v1448 = vsel %vm1343, %v1447, %v967
        %v1449 = vrot.slane %v971, 6
        %v1450 = vsel %vm1346, %v1449, %v1448
        %v1451 = vrot.slane %v973, 5
        %v1452 = vsel %vm1349, %v1451, %v1450
        %v1453 = vrot.slane %v977, 7
        %v1454 = vsel %vm1343, %v1453, %v975
        %v1455 = vrot.slane %v979, 6
        %v1456 = vsel %vm1346, %v1455, %v1454
        %v1457 = vrot.slane %v981, 5
        %v1458 = vsel %vm1349, %v1457, %v1456
        %v1459 = vrot.slane %v985, 7
        %v1460 = vsel %vm1343, %v1459, %v983
        %v1461 = vrot.slane %v987, 6
        %v1462 = vsel %vm1346, %v1461, %v1460
        %v1463 = vrot.slane %v989, 5
        %v1464 = vsel %vm1349, %v1463, %v1462
        %v1465 = vrot.slane %v993, 7
        %v1466 = vsel %vm1343, %v1465, %v991
        %v1467 = vrot.slane %v995, 6
        %v1468 = vsel %vm1346, %v1467, %v1466
        %v1469 = vrot.slane %v997, 5
        %v1470 = vsel %vm1349, %v1469, %v1468
        %v1471 = vrot.slane %v1001, 7
        %v1472 = vsel %vm1343, %v1471, %v999
        %v1473 = vrot.slane %v1003, 6
        %v1474 = vsel %vm1346, %v1473, %v1472
        %v1475 = vrot.slane %v1005, 5
        %v1476 = vsel %vm1349, %v1475, %v1474
        %v1477 = vrot.slane %v1009, 7
        %v1478 = vsel %vm1343, %v1477, %v1007
        %v1479 = vrot.slane %v1011, 6
        %v1480 = vsel %vm1346, %v1479, %v1478
        %v1481 = vrot.slane %v1013, 5
        %v1482 = vsel %vm1349, %v1481, %v1480
        %v1483 = vrot.slane %v1017, 7
        %v1484 = vsel %vm1343, %v1483, %v1015
        %v1485 = vrot.slane %v1019, 6
        %v1486 = vsel %vm1346, %v1485, %v1484
        %v1487 = vrot.slane %v1021, 5
        %v1488 = vsel %vm1349, %v1487, %v1486
        %v1489 = vrot.slane %v1025, 7
        %v1490 = vsel %vm1343, %v1489, %v1023
        %v1491 = vrot.slane %v1027, 6
        %v1492 = vsel %vm1346, %v1491, %v1490
        %v1493 = vrot.slane %v1029, 5
        %v1494 = vsel %vm1349, %v1493, %v1492
        %v1495 = vrot.slane %v1033, 7
        %v1496 = vsel %vm1343, %v1495, %v1031
        %v1497 = vrot.slane %v1035, 6
        %v1498 = vsel %vm1346, %v1497, %v1496
        %v1499 = vrot.slane %v1037, 5
        %v1500 = vsel %vm1349, %v1499, %v1498
        %v1501 = vrot.slane %v1041, 7
        %v1502 = vsel %vm1343, %v1501, %v1039
        %v1503 = vrot.slane %v1043, 6
        %v1504 = vsel %vm1346, %v1503, %v1502
        %v1505 = vrot.slane %v1045, 5
        %v1506 = vsel %vm1349, %v1505, %v1504
        %v1507 = vrot.slane %v1049, 7
        %v1508 = vsel %vm1343, %v1507, %v1047
        %v1509 = vrot.slane %v1051, 6
        %v1510 = vsel %vm1346, %v1509, %v1508
        %v1511 = vrot.slane %v1053, 5
        %v1512 = vsel %vm1349, %v1511, %v1510
        %v1513 = vrot.slane %v1057, 7
        %v1514 = vsel %vm1343, %v1513, %v1055
        %v1515 = vrot.slane %v1059, 6
        %v1516 = vsel %vm1346, %v1515, %v1514
        %v1517 = vrot.slane %v1061, 5
        %v1518 = vsel %vm1349, %v1517, %v1516
        %v1519 = vrot.slane %v1065, 7
        %v1520 = vsel %vm1343, %v1519, %v1063
        %v1521 = vrot.slane %v1067, 6
        %v1522 = vsel %vm1346, %v1521, %v1520
        %v1523 = vrot.slane %v1069, 5
        %v1524 = vsel %vm1349, %v1523, %v1522
        %v1525 = vrot.slane %v1073, 7
        %v1526 = vsel %vm1343, %v1525, %v1071
        %v1527 = vrot.slane %v1075, 6
        %v1528 = vsel %vm1346, %v1527, %v1526
        %v1529 = vrot.slane %v1077, 5
        %v1530 = vsel %vm1349, %v1529, %v1528
        %v1531 = vrot.slane %v1081, 7
        %v1532 = vsel %vm1343, %v1531, %v1079
        %v1533 = vrot.slane %v1083, 6
        %v1534 = vsel %vm1346, %v1533, %v1532
        %v1535 = vrot.slane %v1085, 5
        %v1536 = vsel %vm1349, %v1535, %v1534
        %v1537 = vrot.slane %v1089, 7
        %v1538 = vsel %vm1343, %v1537, %v1087
        %v1539 = vrot.slane %v1091, 6
        %v1540 = vsel %vm1346, %v1539, %v1538
        %v1541 = vrot.slane %v1093, 5
        %v1542 = vsel %vm1349, %v1541, %v1540
        %v1543 = vrot.slane %v1097, 7
        %v1544 = vsel %vm1343, %v1543, %v1095
        %v1545 = vrot.slane %v1099, 6
        %v1546 = vsel %vm1346, %v1545, %v1544
        %v1547 = vrot.slane %v1101, 5
        %v1548 = vsel %vm1349, %v1547, %v1546
        %v1549 = vrot.slane %v1105, 7
        %v1550 = vsel %vm1343, %v1549, %v1103
        %v1551 = vrot.slane %v1107, 6
        %v1552 = vsel %vm1346, %v1551, %v1550
        %v1553 = vrot.slane %v1109, 5
        %v1554 = vsel %vm1349, %v1553, %v1552
        %v1555 = vrot.slane %v1113, 7
        %v1556 = vsel %vm1343, %v1555, %v1111
        %v1557 = vrot.slane %v1115, 6
        %v1558 = vsel %vm1346, %v1557, %v1556
        %v1559 = vrot.slane %v1117, 5
        %v1560 = vsel %vm1349, %v1559, %v1558
        %v1561 = vrot.slane %v1121, 7
        %v1562 = vsel %vm1343, %v1561, %v1119
        %v1563 = vrot.slane %v1123, 6
        %v1564 = vsel %vm1346, %v1563, %v1562
        %v1565 = vrot.slane %v1125, 5
        %v1566 = vsel %vm1349, %v1565, %v1564
        %v1567 = vrot.slane %v1129, 7
        %v1568 = vsel %vm1343, %v1567, %v1127
        %v1569 = vrot.slane %v1131, 6
        %v1570 = vsel %vm1346, %v1569, %v1568
        %v1571 = vrot.slane %v1133, 5
        %v1572 = vsel %vm1349, %v1571, %v1570
        %v1573 = vrot.slane %v1137, 7
        %v1574 = vsel %vm1343, %v1573, %v1135
        %v1575 = vrot.slane %v1139, 6
        %v1576 = vsel %vm1346, %v1575, %v1574
        %v1577 = vrot.slane %v1141, 5
        %v1578 = vsel %vm1349, %v1577, %v1576
        %v1579 = vrot.slane %v1145, 7
        %v1580 = vsel %vm1343, %v1579, %v1143
        %v1581 = vrot.slane %v1147, 6
        %v1582 = vsel %vm1346, %v1581, %v1580
        %v1583 = vrot.slane %v1149, 5
        %v1584 = vsel %vm1349, %v1583, %v1582
        %v1585 = vrot.slane %v1153, 7
        %v1586 = vsel %vm1343, %v1585, %v1151
        %v1587 = vrot.slane %v1155, 6
        %v1588 = vsel %vm1346, %v1587, %v1586
        %v1589 = vrot.slane %v1157, 5
        %v1590 = vsel %vm1349, %v1589, %v1588
        %v1591 = vrot.slane %v1161, 7
        %v1592 = vsel %vm1343, %v1591, %v1159
        %v1593 = vrot.slane %v1163, 6
        %v1594 = vsel %vm1346, %v1593, %v1592
        %v1595 = vrot.slane %v1165, 5
        %v1596 = vsel %vm1349, %v1595, %v1594
        %v1597 = vrot.slane %v1169, 7
        %v1598 = vsel %vm1343, %v1597, %v1167
        %v1599 = vrot.slane %v1171, 6
        %v1600 = vsel %vm1346, %v1599, %v1598
        %v1601 = vrot.slane %v1173, 5
        %v1602 = vsel %vm1349, %v1601, %v1600
        %v1603 = vrot.slane %v1177, 7
        %v1604 = vsel %vm1343, %v1603, %v1175
        %v1605 = vrot.slane %v1179, 6
        %v1606 = vsel %vm1346, %v1605, %v1604
        %v1607 = vrot.slane %v1181, 5
        %v1608 = vsel %vm1349, %v1607, %v1606
        %v1609 = vrot.slane %v1185, 7
        %v1610 = vsel %vm1343, %v1609, %v1183
        %v1611 = vrot.slane %v1187, 6
        %v1612 = vsel %vm1346, %v1611, %v1610
        %v1613 = vrot.slane %v1189, 5
        %v1614 = vsel %vm1349, %v1613, %v1612
        %v1615 = vrot.slane %v1193, 7
        %v1616 = vsel %vm1343, %v1615, %v1191
        %v1617 = vrot.slane %v1195, 6
        %v1618 = vsel %vm1346, %v1617, %v1616
        %v1619 = vrot.slane %v1197, 5
        %v1620 = vsel %vm1349, %v1619, %v1618
        %v1621 = vrot.slane %v1201, 7
        %v1622 = vsel %vm1343, %v1621, %v1199
        %v1623 = vrot.slane %v1203, 6
        %v1624 = vsel %vm1346, %v1623, %v1622
        %v1625 = vrot.slane %v1205, 5
        %v1626 = vsel %vm1349, %v1625, %v1624
        %v1627 = vrot.slane %v1209, 7
        %v1628 = vsel %vm1343, %v1627, %v1207
        %v1629 = vrot.slane %v1211, 6
        %v1630 = vsel %vm1346, %v1629, %v1628
        %v1631 = vrot.slane %v1213, 5
        %v1632 = vsel %vm1349, %v1631, %v1630
        %v1633 = vrot.slane %v1217, 7
        %v1634 = vsel %vm1343, %v1633, %v1215
        %v1635 = vrot.slane %v1219, 6
        %v1636 = vsel %vm1346, %v1635, %v1634
        %v1637 = vrot.slane %v1221, 5
        %v1638 = vsel %vm1349, %v1637, %v1636
        %v1639 = vrot.slane %v1225, 7
        %v1640 = vsel %vm1343, %v1639, %v1223
        %v1641 = vrot.slane %v1227, 6
        %v1642 = vsel %vm1346, %v1641, %v1640
        %v1643 = vrot.slane %v1229, 5
        %v1644 = vsel %vm1349, %v1643, %v1642
        %v1645 = vrot.slane %v1233, 7
        %v1646 = vsel %vm1343, %v1645, %v1231
        %v1647 = vrot.slane %v1235, 6
        %v1648 = vsel %vm1346, %v1647, %v1646
        %v1649 = vrot.slane %v1237, 5
        %v1650 = vsel %vm1349, %v1649, %v1648
        %v1651 = vrot.slane %v1241, 7
        %v1652 = vsel %vm1343, %v1651, %v1239
        %v1653 = vrot.slane %v1243, 6
        %v1654 = vsel %vm1346, %v1653, %v1652
        %v1655 = vrot.slane %v1245, 5
        %v1656 = vsel %vm1349, %v1655, %v1654
        %v1657 = vrot.slane %v1249, 7
        %v1658 = vsel %vm1343, %v1657, %v1247
        %v1659 = vrot.slane %v1251, 6
        %v1660 = vsel %vm1346, %v1659, %v1658
        %v1661 = vrot.slane %v1253, 5
        %v1662 = vsel %vm1349, %v1661, %v1660
        %v1663 = vrot.slane %v1257, 7
        %v1664 = vsel %vm1343, %v1663, %v1255
        %v1665 = vrot.slane %v1259, 6
        %v1666 = vsel %vm1346, %v1665, %v1664
        %v1667 = vrot.slane %v1261, 5
        %v1668 = vsel %vm1349, %v1667, %v1666
        %v1669 = vrot.slane %v1265, 7
        %v1670 = vsel %vm1343, %v1669, %v1263
        %v1671 = vrot.slane %v1267, 6
        %v1672 = vsel %vm1346, %v1671, %v1670
        %v1673 = vrot.slane %v1269, 5
        %v1674 = vsel %vm1349, %v1673, %v1672
        %v1675 = vrot.slane %v1273, 7
        %v1676 = vsel %vm1343, %v1675, %v1271
        %v1677 = vrot.slane %v1275, 6
        %v1678 = vsel %vm1346, %v1677, %v1676
        %v1679 = vrot.slane %v1277, 5
        %v1680 = vsel %vm1349, %v1679, %v1678
        %v1681 = vrot.slane %v1281, 7
        %v1682 = vsel %vm1343, %v1681, %v1279
        %v1683 = vrot.slane %v1283, 6
        %v1684 = vsel %vm1346, %v1683, %v1682
        %v1685 = vrot.slane %v1285, 5
        %v1686 = vsel %vm1349, %v1685, %v1684
        %v1687 = vrot.slane %v1289, 7
        %v1688 = vsel %vm1343, %v1687, %v1287
        %v1689 = vrot.slane %v1291, 6
        %v1690 = vsel %vm1346, %v1689, %v1688
        %v1691 = vrot.slane %v1293, 5
        %v1692 = vsel %vm1349, %v1691, %v1690
        %v1693 = vrot.slane %v1297, 7
        %v1694 = vsel %vm1343, %v1693, %v1295
        %v1695 = vrot.slane %v1299, 6
        %v1696 = vsel %vm1346, %v1695, %v1694
        %v1697 = vrot.slane %v1301, 5
        %v1698 = vsel %vm1349, %v1697, %v1696
        %v1699 = vrot.slane %v1305, 7
        %v1700 = vsel %vm1343, %v1699, %v1303
        %v1701 = vrot.slane %v1307, 6
        %v1702 = vsel %vm1346, %v1701, %v1700
        %v1703 = vrot.slane %v1309, 5
        %v1704 = vsel %vm1349, %v1703, %v1702
        %v1705 = vrot.slane %v1313, 7
        %v1706 = vsel %vm1343, %v1705, %v1311
        %v1707 = vrot.slane %v1315, 6
        %v1708 = vsel %vm1346, %v1707, %v1706
        %v1709 = vrot.slane %v1317, 5
        %v1710 = vsel %vm1349, %v1709, %v1708
        %v1711 = vrot.slane %v1321, 7
        %v1712 = vsel %vm1343, %v1711, %v1319
        %v1713 = vrot.slane %v1323, 6
        %v1714 = vsel %vm1346, %v1713, %v1712
        %v1715 = vrot.slane %v1325, 5
        %v1716 = vsel %vm1349, %v1715, %v1714
        %v1717 = vrot.slane %v1329, 7
        %v1718 = vsel %vm1343, %v1717, %v1327
        %v1719 = vrot.slane %v1331, 6
        %v1720 = vsel %vm1346, %v1719, %v1718
        %v1721 = vrot.slane %v1333, 5
        %v1722 = vsel %vm1349, %v1721, %v1720
        %v1723 = vrot.slane %v1337, 7
        %v1724 = vsel %vm1343, %v1723, %v1335
        %v1725 = vrot.slane %v1339, 6
        %v1726 = vsel %vm1346, %v1725, %v1724
        %v1727 = vrot.slane %v1341, 5
        %v1728 = vsel %vm1349, %v1727, %v1726
        %v1793 = vrot.slane %v1362, 4
        %vm1794 = vcmask 1047556
        %v1795 = vsel %vm1794, %v1793, %v1350
        %v1797 = vunpack.c.l.s4 1983009808
        %v1798 = vunpack.c.0.s8 %v1797
        %v1799 = vperm.slane %v1795, %v1798
        %v1800 = vrot.slane %v1368, 4
        %v1801 = vsel %vm1794, %v1800, %v1356
        %v1803 = vunpack.c.l.s4 1983009808
        %v1804 = vunpack.c.0.s8 %v1803
        %v1805 = vperm.slane %v1801, %v1804
        %v1806 = vrot.slane %v1386, 4
        %v1807 = vsel %vm1794, %v1806, %v1374
        %v1809 = vunpack.c.l.s4 1983009808
        %v1810 = vunpack.c.0.s8 %v1809
        %v1811 = vperm.slane %v1807, %v1810
        %v1812 = vrot.slane %v1392, 4
        %v1813 = vsel %vm1794, %v1812, %v1380
        %v1815 = vunpack.c.l.s4 1983009808
        %v1816 = vunpack.c.0.s8 %v1815
        %v1817 = vperm.slane %v1813, %v1816
        %v1818 = vrot.slane %v1805, 4
        %v1819 = vsel %vm1794, %v1818, %v1799
        %v1820 = vrot.slane %v1799, 4
        %v1821 = vsel %vm1794, %v1805, %v1820
        %v1823 = vunpack.c.l.s4 1934713408
        %v1824 = vunpack.c.0.s8 %v1823
        %v1825 = vperm.slane %v1819, %v1824
        %v1827 = vunpack.c.l.s4 1934713408
        %v1828 = vunpack.c.0.s8 %v1827
        %v1829 = vperm.slane %v1821, %v1828
        %v1830 = vrot.slane %v1817, 4
        %v1831 = vsel %vm1794, %v1830, %v1811
        %v1832 = vrot.slane %v1811, 4
        %v1833 = vsel %vm1794, %v1817, %v1832
        %v1835 = vunpack.c.l.s4 1934713408
        %v1836 = vunpack.c.0.s8 %v1835
        %v1837 = vperm.slane %v1831, %v1836
        %v1839 = vunpack.c.l.s4 1934713408
        %v1840 = vunpack.c.0.s8 %v1839
        %v1841 = vperm.slane %v1833, %v1840
        %v1842 = vrot.slane %v1837, 4
        %v1843 = vsel %vm1794, %v1842, %v1825
        %v1844 = vrot.slane %v1825, 4
        %v1845 = vsel %vm1794, %v1837, %v1844
        %v1846 = vrot.slane %v1841, 4
        %v1847 = vsel %vm1794, %v1846, %v1829
        %v1848 = vrot.slane %v1829, 4
        %v1849 = vsel %vm1794, %v1841, %v1848
        %v1850 = vrot.slane %v1410, 4
        %v1851 = vsel %vm1794, %v1850, %v1398
        %v1853 = vunpack.c.l.s4 1983009808
        %v1854 = vunpack.c.0.s8 %v1853
        %v1855 = vperm.slane %v1851, %v1854
        %v1856 = vrot.slane %v1416, 4
        %v1857 = vsel %vm1794, %v1856, %v1404
        %v1859 = vunpack.c.l.s4 1983009808
        %v1860 = vunpack.c.0.s8 %v1859
        %v1861 = vperm.slane %v1857, %v1860
        %v1862 = vrot.slane %v1434, 4
        %v1863 = vsel %vm1794, %v1862, %v1422
        %v1865 = vunpack.c.l.s4 1983009808
        %v1866 = vunpack.c.0.s8 %v1865
        %v1867 = vperm.slane %v1863, %v1866
        %v1868 = vrot.slane %v1440, 4
        %v1869 = vsel %vm1794, %v1868, %v1428
        %v1871 = vunpack.c.l.s4 1983009808
        %v1872 = vunpack.c.0.s8 %v1871
        %v1873 = vperm.slane %v1869, %v1872
        %v1874 = vrot.slane %v1861, 4
        %v1875 = vsel %vm1794, %v1874, %v1855
        %v1876 = vrot.slane %v1855, 4
        %v1877 = vsel %vm1794, %v1861, %v1876
        %v1879 = vunpack.c.l.s4 1934713408
        %v1880 = vunpack.c.0.s8 %v1879
        %v1881 = vperm.slane %v1875, %v1880
        %v1883 = vunpack.c.l.s4 1934713408
        %v1884 = vunpack.c.0.s8 %v1883
        %v1885 = vperm.slane %v1877, %v1884
        %v1886 = vrot.slane %v1873, 4
        %v1887 = vsel %vm1794, %v1886, %v1867
        %v1888 = vrot.slane %v1867, 4
        %v1889 = vsel %vm1794, %v1873, %v1888
        %v1891 = vunpack.c.l.s4 1934713408
        %v1892 = vunpack.c.0.s8 %v1891
        %v1893 = vperm.slane %v1887, %v1892
        %v1895 = vunpack.c.l.s4 1934713408
        %v1896 = vunpack.c.0.s8 %v1895
        %v1897 = vperm.slane %v1889, %v1896
        %v1898 = vrot.slane %v1893, 4
        %v1899 = vsel %vm1794, %v1898, %v1881
        %v1900 = vrot.slane %v1881, 4
        %v1901 = vsel %vm1794, %v1893, %v1900
        %v1902 = vrot.slane %v1897, 4
        %v1903 = vsel %vm1794, %v1902, %v1885
        %v1904 = vrot.slane %v1885, 4
        %v1905 = vsel %vm1794, %v1897, %v1904
        %v1906 = vrot.slane %v1458, 4
        %v1907 = vsel %vm1794, %v1906, %v1446
        %v1909 = vunpack.c.l.s4 1983009808
        %v1910 = vunpack.c.0.s8 %v1909
        %v1911 = vperm.slane %v1907, %v1910
        %v1912 = vrot.slane %v1464, 4
        %v1913 = vsel %vm1794, %v1912, %v1452
        %v1915 = vunpack.c.l.s4 1983009808
        %v1916 = vunpack.c.0.s8 %v1915
        %v1917 = vperm.slane %v1913, %v1916
        %v1918 = vrot.slane %v1482, 4
        %v1919 = vsel %vm1794, %v1918, %v1470
        %v1921 = vunpack.c.l.s4 1983009808
        %v1922 = vunpack.c.0.s8 %v1921
        %v1923 = vperm.slane %v1919, %v1922
        %v1924 = vrot.slane %v1488, 4
        %v1925 = vsel %vm1794, %v1924, %v1476
        %v1927 = vunpack.c.l.s4 1983009808
        %v1928 = vunpack.c.0.s8 %v1927
        %v1929 = vperm.slane %v1925, %v1928
        %v1930 = vrot.slane %v1917, 4
        %v1931 = vsel %vm1794, %v1930, %v1911
        %v1932 = vrot.slane %v1911, 4
        %v1933 = vsel %vm1794, %v1917, %v1932
        %v1935 = vunpack.c.l.s4 1934713408
        %v1936 = vunpack.c.0.s8 %v1935
        %v1937 = vperm.slane %v1931, %v1936
        %v1939 = vunpack.c.l.s4 1934713408
        %v1940 = vunpack.c.0.s8 %v1939
        %v1941 = vperm.slane %v1933, %v1940
        %v1942 = vrot.slane %v1929, 4
        %v1943 = vsel %vm1794, %v1942, %v1923
        %v1944 = vrot.slane %v1923, 4
        %v1945 = vsel %vm1794, %v1929, %v1944
        %v1947 = vunpack.c.l.s4 1934713408
        %v1948 = vunpack.c.0.s8 %v1947
        %v1949 = vperm.slane %v1943, %v1948
        %v1951 = vunpack.c.l.s4 1934713408
        %v1952 = vunpack.c.0.s8 %v1951
        %v1953 = vperm.slane %v1945, %v1952
        %v1954 = vrot.slane %v1949, 4
        %v1955 = vsel %vm1794, %v1954, %v1937
        %v1956 = vrot.slane %v1937, 4
        %v1957 = vsel %vm1794, %v1949, %v1956
        %v1958 = vrot.slane %v1953, 4
        %v1959 = vsel %vm1794, %v1958, %v1941
        %v1960 = vrot.slane %v1941, 4
        %v1961 = vsel %vm1794, %v1953, %v1960
        %v1962 = vrot.slane %v1506, 4
        %v1963 = vsel %vm1794, %v1962, %v1494
        %v1965 = vunpack.c.l.s4 1983009808
        %v1966 = vunpack.c.0.s8 %v1965
        %v1967 = vperm.slane %v1963, %v1966
        %v1968 = vrot.slane %v1512, 4
        %v1969 = vsel %vm1794, %v1968, %v1500
        %v1971 = vunpack.c.l.s4 1983009808
        %v1972 = vunpack.c.0.s8 %v1971
        %v1973 = vperm.slane %v1969, %v1972
        %v1974 = vrot.slane %v1530, 4
        %v1975 = vsel %vm1794, %v1974, %v1518
        %v1977 = vunpack.c.l.s4 1983009808
        %v1978 = vunpack.c.0.s8 %v1977
        %v1979 = vperm.slane %v1975, %v1978
        %v1980 = vrot.slane %v1536, 4
        %v1981 = vsel %vm1794, %v1980, %v1524
        %v1983 = vunpack.c.l.s4 1983009808
        %v1984 = vunpack.c.0.s8 %v1983
        %v1985 = vperm.slane %v1981, %v1984
        %v1986 = vrot.slane %v1973, 4
        %v1987 = vsel %vm1794, %v1986, %v1967
        %v1988 = vrot.slane %v1967, 4
        %v1989 = vsel %vm1794, %v1973, %v1988
        %v1991 = vunpack.c.l.s4 1934713408
        %v1992 = vunpack.c.0.s8 %v1991
        %v1993 = vperm.slane %v1987, %v1992
        %v1995 = vunpack.c.l.s4 1934713408
        %v1996 = vunpack.c.0.s8 %v1995
        %v1997 = vperm.slane %v1989, %v1996
        %v1998 = vrot.slane %v1985, 4
        %v1999 = vsel %vm1794, %v1998, %v1979
        %v2000 = vrot.slane %v1979, 4
        %v2001 = vsel %vm1794, %v1985, %v2000
        %v2003 = vunpack.c.l.s4 1934713408
        %v2004 = vunpack.c.0.s8 %v2003
        %v2005 = vperm.slane %v1999, %v2004
        %v2007 = vunpack.c.l.s4 1934713408
        %v2008 = vunpack.c.0.s8 %v2007
        %v2009 = vperm.slane %v2001, %v2008
        %v2010 = vrot.slane %v2005, 4
        %v2011 = vsel %vm1794, %v2010, %v1993
        %v2012 = vrot.slane %v1993, 4
        %v2013 = vsel %vm1794, %v2005, %v2012
        %v2014 = vrot.slane %v2009, 4
        %v2015 = vsel %vm1794, %v2014, %v1997
        %v2016 = vrot.slane %v1997, 4
        %v2017 = vsel %vm1794, %v2009, %v2016
        %v2018 = vrot.slane %v1554, 4
        %v2019 = vsel %vm1794, %v2018, %v1542
        %v2021 = vunpack.c.l.s4 1983009808
        %v2022 = vunpack.c.0.s8 %v2021
        %v2023 = vperm.slane %v2019, %v2022
        %v2024 = vrot.slane %v1560, 4
        %v2025 = vsel %vm1794, %v2024, %v1548
        %v2027 = vunpack.c.l.s4 1983009808
        %v2028 = vunpack.c.0.s8 %v2027
        %v2029 = vperm.slane %v2025, %v2028
        %v2030 = vrot.slane %v1578, 4
        %v2031 = vsel %vm1794, %v2030, %v1566
        %v2033 = vunpack.c.l.s4 1983009808
        %v2034 = vunpack.c.0.s8 %v2033
        %v2035 = vperm.slane %v2031, %v2034
        %v2036 = vrot.slane %v1584, 4
        %v2037 = vsel %vm1794, %v2036, %v1572
        %v2039 = vunpack.c.l.s4 1983009808
        %v2040 = vunpack.c.0.s8 %v2039
        %v2041 = vperm.slane %v2037, %v2040
        %v2042 = vrot.slane %v2029, 4
        %v2043 = vsel %vm1794, %v2042, %v2023
        %v2044 = vrot.slane %v2023, 4
        %v2045 = vsel %vm1794, %v2029, %v2044
        %v2047 = vunpack.c.l.s4 1934713408
        %v2048 = vunpack.c.0.s8 %v2047
        %v2049 = vperm.slane %v2043, %v2048
        %v2051 = vunpack.c.l.s4 1934713408
        %v2052 = vunpack.c.0.s8 %v2051
        %v2053 = vperm.slane %v2045, %v2052
        %v2054 = vrot.slane %v2041, 4
        %v2055 = vsel %vm1794, %v2054, %v2035
        %v2056 = vrot.slane %v2035, 4
        %v2057 = vsel %vm1794, %v2041, %v2056
        %v2059 = vunpack.c.l.s4 1934713408
        %v2060 = vunpack.c.0.s8 %v2059
        %v2061 = vperm.slane %v2055, %v2060
        %v2063 = vunpack.c.l.s4 1934713408
        %v2064 = vunpack.c.0.s8 %v2063
        %v2065 = vperm.slane %v2057, %v2064
        %v2066 = vrot.slane %v2061, 4
        %v2067 = vsel %vm1794, %v2066, %v2049
        %v2068 = vrot.slane %v2049, 4
        %v2069 = vsel %vm1794, %v2061, %v2068
        %v2070 = vrot.slane %v2065, 4
        %v2071 = vsel %vm1794, %v2070, %v2053
        %v2072 = vrot.slane %v2053, 4
        %v2073 = vsel %vm1794, %v2065, %v2072
        %v2074 = vrot.slane %v1602, 4
        %v2075 = vsel %vm1794, %v2074, %v1590
        %v2077 = vunpack.c.l.s4 1983009808
        %v2078 = vunpack.c.0.s8 %v2077
        %v2079 = vperm.slane %v2075, %v2078
        %v2080 = vrot.slane %v1608, 4
        %v2081 = vsel %vm1794, %v2080, %v1596
        %v2083 = vunpack.c.l.s4 1983009808
        %v2084 = vunpack.c.0.s8 %v2083
        %v2085 = vperm.slane %v2081, %v2084
        %v2086 = vrot.slane %v1626, 4
        %v2087 = vsel %vm1794, %v2086, %v1614
        %v2089 = vunpack.c.l.s4 1983009808
        %v2090 = vunpack.c.0.s8 %v2089
        %v2091 = vperm.slane %v2087, %v2090
        %v2092 = vrot.slane %v1632, 4
        %v2093 = vsel %vm1794, %v2092, %v1620
        %v2095 = vunpack.c.l.s4 1983009808
        %v2096 = vunpack.c.0.s8 %v2095
        %v2097 = vperm.slane %v2093, %v2096
        %v2098 = vrot.slane %v2085, 4
        %v2099 = vsel %vm1794, %v2098, %v2079
        %v2100 = vrot.slane %v2079, 4
        %v2101 = vsel %vm1794, %v2085, %v2100
        %v2103 = vunpack.c.l.s4 1934713408
        %v2104 = vunpack.c.0.s8 %v2103
        %v2105 = vperm.slane %v2099, %v2104
        %v2107 = vunpack.c.l.s4 1934713408
        %v2108 = vunpack.c.0.s8 %v2107
        %v2109 = vperm.slane %v2101, %v2108
        %v2110 = vrot.slane %v2097, 4
        %v2111 = vsel %vm1794, %v2110, %v2091
        %v2112 = vrot.slane %v2091, 4
        %v2113 = vsel %vm1794, %v2097, %v2112
        %v2115 = vunpack.c.l.s4 1934713408
        %v2116 = vunpack.c.0.s8 %v2115
        %v2117 = vperm.slane %v2111, %v2116
        %v2119 = vunpack.c.l.s4 1934713408
        %v2120 = vunpack.c.0.s8 %v2119
        %v2121 = vperm.slane %v2113, %v2120
        %v2122 = vrot.slane %v2117, 4
        %v2123 = vsel %vm1794, %v2122, %v2105
        %v2124 = vrot.slane %v2105, 4
        %v2125 = vsel %vm1794, %v2117, %v2124
        %v2126 = vrot.slane %v2121, 4
        %v2127 = vsel %vm1794, %v2126, %v2109
        %v2128 = vrot.slane %v2109, 4
        %v2129 = vsel %vm1794, %v2121, %v2128
        %v2130 = vrot.slane %v1650, 4
        %v2131 = vsel %vm1794, %v2130, %v1638
        %v2133 = vunpack.c.l.s4 1983009808
        %v2134 = vunpack.c.0.s8 %v2133
        %v2135 = vperm.slane %v2131, %v2134
        %v2136 = vrot.slane %v1656, 4
        %v2137 = vsel %vm1794, %v2136, %v1644
        %v2139 = vunpack.c.l.s4 1983009808
        %v2140 = vunpack.c.0.s8 %v2139
        %v2141 = vperm.slane %v2137, %v2140
        %v2142 = vrot.slane %v1674, 4
        %v2143 = vsel %vm1794, %v2142, %v1662
        %v2145 = vunpack.c.l.s4 1983009808
        %v2146 = vunpack.c.0.s8 %v2145
        %v2147 = vperm.slane %v2143, %v2146
        %v2148 = vrot.slane %v1680, 4
        %v2149 = vsel %vm1794, %v2148, %v1668
        %v2151 = vunpack.c.l.s4 1983009808
        %v2152 = vunpack.c.0.s8 %v2151
        %v2153 = vperm.slane %v2149, %v2152
        %v2154 = vrot.slane %v2141, 4
        %v2155 = vsel %vm1794, %v2154, %v2135
        %v2156 = vrot.slane %v2135, 4
        %v2157 = vsel %vm1794, %v2141, %v2156
        %v2159 = vunpack.c.l.s4 1934713408
        %v2160 = vunpack.c.0.s8 %v2159
        %v2161 = vperm.slane %v2155, %v2160
        %v2163 = vunpack.c.l.s4 1934713408
        %v2164 = vunpack.c.0.s8 %v2163
        %v2165 = vperm.slane %v2157, %v2164
        %v2166 = vrot.slane %v2153, 4
        %v2167 = vsel %vm1794, %v2166, %v2147
        %v2168 = vrot.slane %v2147, 4
        %v2169 = vsel %vm1794, %v2153, %v2168
        %v2171 = vunpack.c.l.s4 1934713408
        %v2172 = vunpack.c.0.s8 %v2171
        %v2173 = vperm.slane %v2167, %v2172
        %v2175 = vunpack.c.l.s4 1934713408
        %v2176 = vunpack.c.0.s8 %v2175
        %v2177 = vperm.slane %v2169, %v2176
        %v2178 = vrot.slane %v2173, 4
        %v2179 = vsel %vm1794, %v2178, %v2161
        %v2180 = vrot.slane %v2161, 4
        %v2181 = vsel %vm1794, %v2173, %v2180
        %v2182 = vrot.slane %v2177, 4
        %v2183 = vsel %vm1794, %v2182, %v2165
        %v2184 = vrot.slane %v2165, 4
        %v2185 = vsel %vm1794, %v2177, %v2184
        %v2186 = vrot.slane %v1698, 4
        %v2187 = vsel %vm1794, %v2186, %v1686
        %v2189 = vunpack.c.l.s4 1983009808
        %v2190 = vunpack.c.0.s8 %v2189
        %v2191 = vperm.slane %v2187, %v2190
        %v2192 = vrot.slane %v1704, 4
        %v2193 = vsel %vm1794, %v2192, %v1692
        %v2195 = vunpack.c.l.s4 1983009808
        %v2196 = vunpack.c.0.s8 %v2195
        %v2197 = vperm.slane %v2193, %v2196
        %v2198 = vrot.slane %v1722, 4
        %v2199 = vsel %vm1794, %v2198, %v1710
        %v2201 = vunpack.c.l.s4 1983009808
        %v2202 = vunpack.c.0.s8 %v2201
        %v2203 = vperm.slane %v2199, %v2202
        %v2204 = vrot.slane %v1728, 4
        %v2205 = vsel %vm1794, %v2204, %v1716
        %v2207 = vunpack.c.l.s4 1983009808
        %v2208 = vunpack.c.0.s8 %v2207
        %v2209 = vperm.slane %v2205, %v2208
        %v2210 = vrot.slane %v2197, 4
        %v2211 = vsel %vm1794, %v2210, %v2191
        %v2212 = vrot.slane %v2191, 4
        %v2213 = vsel %vm1794, %v2197, %v2212
        %v2215 = vunpack.c.l.s4 1934713408
        %v2216 = vunpack.c.0.s8 %v2215
        %v2217 = vperm.slane %v2211, %v2216
        %v2219 = vunpack.c.l.s4 1934713408
        %v2220 = vunpack.c.0.s8 %v2219
        %v2221 = vperm.slane %v2213, %v2220
        %v2222 = vrot.slane %v2209, 4
        %v2223 = vsel %vm1794, %v2222, %v2203
        %v2224 = vrot.slane %v2203, 4
        %v2225 = vsel %vm1794, %v2209, %v2224
        %v2227 = vunpack.c.l.s4 1934713408
        %v2228 = vunpack.c.0.s8 %v2227
        %v2229 = vperm.slane %v2223, %v2228
        %v2231 = vunpack.c.l.s4 1934713408
        %v2232 = vunpack.c.0.s8 %v2231
        %v2233 = vperm.slane %v2225, %v2232
        %v2234 = vrot.slane %v2229, 4
        %v2235 = vsel %vm1794, %v2234, %v2217
        %v2236 = vrot.slane %v2217, 4
        %v2237 = vsel %vm1794, %v2229, %v2236
        %v2238 = vrot.slane %v2233, 4
        %v2239 = vsel %vm1794, %v2238, %v2221
        %v2240 = vrot.slane %v2221, 4
        %v2241 = vsel %vm1794, %v2233, %v2240
        %vm2242 = vcmask 15360
        %v2243 = vsel %vm2242, %v1843, -inf
        %2244 = vmax.xlane.f32.xlu0 %v2243
        %v2245 = vpop.xlane.xlu0 %2244
        %v2246 = vsel %vm2242, %v1899, -inf
        %2247 = vmax.xlane.f32.xlu0 %v2246
        %v2248 = vpop.xlane.xlu0 %2247
        %v2249 = vsel %vm2242, %v1955, -inf
        %2250 = vmax.xlane.f32.xlu0 %v2249
        %v2251 = vpop.xlane.xlu0 %2250
        %v2252 = vsel %vm2242, %v2011, -inf
        %2253 = vmax.xlane.f32.xlu0 %v2252
        %v2254 = vpop.xlane.xlu0 %2253
        %v2255 = vsel %vm2242, %v2067, -inf
        %2256 = vmax.xlane.f32.xlu0 %v2255
        %v2257 = vpop.xlane.xlu0 %2256
        %v2258 = vsel %vm2242, %v2123, -inf
        %2259 = vmax.xlane.f32.xlu0 %v2258
        %v2260 = vpop.xlane.xlu0 %2259
        %v2261 = vsel %vm2242, %v2179, -inf
        %2262 = vmax.xlane.f32.xlu0 %v2261
        %v2263 = vpop.xlane.xlu0 %2262
        %v2264 = vsel %vm2242, %v2235, -inf
        %2265 = vmax.xlane.f32.xlu0 %v2264
        %v2266 = vpop.xlane.xlu0 %2265
        %v2267 = vsel %vm2242, %v1845, -inf
        %2268 = vmax.xlane.f32.xlu0 %v2267
        %v2269 = vpop.xlane.xlu0 %2268
        %v2270 = vsel %vm2242, %v1901, -inf
        %2271 = vmax.xlane.f32.xlu0 %v2270
        %v2272 = vpop.xlane.xlu0 %2271
        %v2273 = vsel %vm2242, %v1957, -inf
        %2274 = vmax.xlane.f32.xlu0 %v2273
        %v2275 = vpop.xlane.xlu0 %2274
        %v2276 = vsel %vm2242, %v2013, -inf
        %2277 = vmax.xlane.f32.xlu0 %v2276
        %v2278 = vpop.xlane.xlu0 %2277
        %v2279 = vsel %vm2242, %v2069, -inf
        %2280 = vmax.xlane.f32.xlu0 %v2279
        %v2281 = vpop.xlane.xlu0 %2280
        %v2282 = vsel %vm2242, %v2125, -inf
        %2283 = vmax.xlane.f32.xlu0 %v2282
        %v2284 = vpop.xlane.xlu0 %2283
        %v2285 = vsel %vm2242, %v2181, -inf
        %2286 = vmax.xlane.f32.xlu0 %v2285
        %v2287 = vpop.xlane.xlu0 %2286
        %v2288 = vsel %vm2242, %v2237, -inf
        %2289 = vmax.xlane.f32.xlu0 %v2288
        %v2290 = vpop.xlane.xlu0 %2289
        %v2291 = vsel %vm2242, %v1847, -inf
        %2292 = vmax.xlane.f32.xlu0 %v2291
        %v2293 = vpop.xlane.xlu0 %2292
        %v2294 = vsel %vm2242, %v1903, -inf
        %2295 = vmax.xlane.f32.xlu0 %v2294
        %v2296 = vpop.xlane.xlu0 %2295
        %v2297 = vsel %vm2242, %v1959, -inf
        %2298 = vmax.xlane.f32.xlu0 %v2297
        %v2299 = vpop.xlane.xlu0 %2298
        %v2300 = vsel %vm2242, %v2015, -inf
        %2301 = vmax.xlane.f32.xlu0 %v2300
        %v2302 = vpop.xlane.xlu0 %2301
        %v2303 = vsel %vm2242, %v2071, -inf
        %2304 = vmax.xlane.f32.xlu0 %v2303
        %v2305 = vpop.xlane.xlu0 %2304
        %v2306 = vsel %vm2242, %v2127, -inf
        %2307 = vmax.xlane.f32.xlu0 %v2306
        %v2308 = vpop.xlane.xlu0 %2307
        %v2309 = vsel %vm2242, %v2183, -inf
        %2310 = vmax.xlane.f32.xlu0 %v2309
        %v2311 = vpop.xlane.xlu0 %2310
        %v2312 = vsel %vm2242, %v2239, -inf
        %2313 = vmax.xlane.f32.xlu0 %v2312
        %v2314 = vpop.xlane.xlu0 %2313
        %v2315 = vsel %vm2242, %v1849, -inf
        %2316 = vmax.xlane.f32.xlu0 %v2315
        %v2317 = vpop.xlane.xlu0 %2316
        %v2318 = vsel %vm2242, %v1905, -inf
        %2319 = vmax.xlane.f32.xlu0 %v2318
        %v2320 = vpop.xlane.xlu0 %2319
        %v2321 = vsel %vm2242, %v1961, -inf
        %2322 = vmax.xlane.f32.xlu0 %v2321
        %v2323 = vpop.xlane.xlu0 %2322
        %v2324 = vsel %vm2242, %v2017, -inf
        %2325 = vmax.xlane.f32.xlu0 %v2324
        %v2326 = vpop.xlane.xlu0 %2325
        %v2327 = vsel %vm2242, %v2073, -inf
        %2328 = vmax.xlane.f32.xlu0 %v2327
        %v2329 = vpop.xlane.xlu0 %2328
        %v2330 = vsel %vm2242, %v2129, -inf
        %2331 = vmax.xlane.f32.xlu0 %v2330
        %v2332 = vpop.xlane.xlu0 %2331
        %v2333 = vsel %vm2242, %v2185, -inf
        %2334 = vmax.xlane.f32.xlu0 %v2333
        %v2335 = vpop.xlane.xlu0 %2334
        %v2336 = vsel %vm2242, %v2241, -inf
        %2337 = vmax.xlane.f32.xlu0 %v2336
        %v2338 = vpop.xlane.xlu0 %2337
        %v2371 = vlaneseq
        %v2372 = vand.u32 %v2371, 127
        %v2373 = vperm.slane %v2245, %v2372
        %v2374 = vadd.s32 %v2372, 4294967288
        %v2375 = vperm.slane %v2248, %v2374
        %vm2376 = vcmask 130112
        %v2377 = vsel %vm2376, %v2375, %v2373
        %v2378 = vadd.s32 %v2372, 4294967280
        %v2379 = vperm.slane %v2251, %v2378
        %vm2380 = vcmask 195712
        %v2381 = vsel %vm2380, %v2379, %v2377
        %v2382 = vadd.s32 %v2372, 4294967272
        %v2383 = vperm.slane %v2254, %v2382
        %vm2384 = vcmask 261312
        %v2385 = vsel %vm2384, %v2383, %v2381
        %v2386 = vadd.s32 %v2372, 4294967264
        %v2387 = vperm.slane %v2257, %v2386
        %vm2388 = vcmask 326912
        %v2389 = vsel %vm2388, %v2387, %v2385
        %v2390 = vadd.s32 %v2372, 4294967256
        %v2391 = vperm.slane %v2260, %v2390
        %vm2392 = vcmask 392512
        %v2393 = vsel %vm2392, %v2391, %v2389
        %v2394 = vadd.s32 %v2372, 4294967248
        %v2395 = vperm.slane %v2263, %v2394
        %vm2396 = vcmask 458112
        %v2397 = vsel %vm2396, %v2395, %v2393
        %v2398 = vadd.s32 %v2372, 4294967240
        %v2399 = vperm.slane %v2266, %v2398
        %vm2400 = vcmask 523712
        %v2401 = vsel %vm2400, %v2399, %v2397
        %v2402 = vperm.slane %v2269, %v2372
        %v2403 = vperm.slane %v2272, %v2374
        %v2404 = vsel %vm2376, %v2403, %v2402
        %v2405 = vperm.slane %v2275, %v2378
        %v2406 = vsel %vm2380, %v2405, %v2404
        %v2407 = vperm.slane %v2278, %v2382
        %v2408 = vsel %vm2384, %v2407, %v2406
        %v2409 = vperm.slane %v2281, %v2386
        %v2410 = vsel %vm2388, %v2409, %v2408
        %v2411 = vperm.slane %v2284, %v2390
        %v2412 = vsel %vm2392, %v2411, %v2410
        %v2413 = vperm.slane %v2287, %v2394
        %v2414 = vsel %vm2396, %v2413, %v2412
        %v2415 = vperm.slane %v2290, %v2398
        %v2416 = vsel %vm2400, %v2415, %v2414
        %v2417 = vperm.slane %v2293, %v2372
        %v2418 = vperm.slane %v2296, %v2374
        %v2419 = vsel %vm2376, %v2418, %v2417
        %v2420 = vperm.slane %v2299, %v2378
        %v2421 = vsel %vm2380, %v2420, %v2419
        %v2422 = vperm.slane %v2302, %v2382
        %v2423 = vsel %vm2384, %v2422, %v2421
        %v2424 = vperm.slane %v2305, %v2386
        %v2425 = vsel %vm2388, %v2424, %v2423
        %v2426 = vperm.slane %v2308, %v2390
        %v2427 = vsel %vm2392, %v2426, %v2425
        %v2428 = vperm.slane %v2311, %v2394
        %v2429 = vsel %vm2396, %v2428, %v2427
        %v2430 = vperm.slane %v2314, %v2398
        %v2431 = vsel %vm2400, %v2430, %v2429
        %v2432 = vperm.slane %v2317, %v2372
        %v2433 = vperm.slane %v2320, %v2374
        %v2434 = vsel %vm2376, %v2433, %v2432
        %v2435 = vperm.slane %v2323, %v2378
        %v2436 = vsel %vm2380, %v2435, %v2434
        %v2437 = vperm.slane %v2326, %v2382
        %v2438 = vsel %vm2384, %v2437, %v2436
        %v2439 = vperm.slane %v2329, %v2386
        %v2440 = vsel %vm2388, %v2439, %v2438
        %v2441 = vperm.slane %v2332, %v2390
        %v2442 = vsel %vm2392, %v2441, %v2440
        %v2443 = vperm.slane %v2335, %v2394
        %v2444 = vsel %vm2396, %v2443, %v2442
        %v2445 = vperm.slane %v2338, %v2398
        %v2446 = vsel %vm2400, %v2445, %v2444
        %v2447 = vsel %vm1343, %v2416, %v2401
        %v2448 = vsel %vm1346, %v2431, %v2447
        %v2449 = vsel %vm1349, %v2446, %v2448
        %vm2451 = vcmask 519168
        %2452 = vst.msk [vmem:[%s245] sm:$0xf] %vm2451, %v2449
        %s2453 = sand.u32 %s140, 1
        %s2454 = scalar_lea.sflag [#allocation4], %s2453
        %s2455 = sand.u32 %s140, 1
        %s2456 = smul.addr %s2455, 4
        %s2457 = scalar_lea.vmem [#allocation5], %s2456
        // Predicated region
        $region45: #{tpu_custom_call.1} parent=39 // pred_check
          %p2458 = pneg %p150
        $region46: #{tpu_custom_call.1} parent=39 // pred_check_branch
          %2460 = sbr.rel (%p2458) target = $region48
        $region47: #{tpu_custom_call.1} parent=39 // pred_region
          %2462 = vsyncadd %s2454, 0
          %s2463 = smul.addr %s22, 4
          %s2464 = scalar_lea.hbm %s5, %s2463
          %s2466 = sshll.u32 %s2457, 4
          %s2467 = int_to_ptr.vmem [resolvable:$true] %s2466
          %s2468 = sshll.u32 %s2464, 4
          %s2469 = int_to_ptr.hbm [resolvable:$true] %s2468
          %2471 = dma.vmem_to_hbm [thread:$0]  %s2467, 64, %s2469, %s2454
        $region48: #{tpu_custom_call.1} parent=39 // pred_fallthru
          _
      $region40: #{tpu_custom_call.1} parent=5 // pred_fallthru
        _
      %p2472 = scmp.le.s32.totalorder 2, %s17
      // Predicated region
      $region49: #{tpu_custom_call.1} parent=5 // pred_check
        %p2473 = pneg %p2472
      $region50: #{tpu_custom_call.1} parent=5 // pred_check_branch
        %2475 = sbr.rel (%p2473) target = $region52
      $region51: #{tpu_custom_call.1} parent=5 // pred_region
        %s2476 = ssub.s32 %s17, 2
        // Predicated region
        $region53: #{tpu_custom_call.1} parent=51 // pred_check
          %p2477 = pneg %p156
        $region54: #{tpu_custom_call.1} parent=51 // pred_check_branch
          %2479 = sbr.rel (%p2477) target = $region56
        $region55: #{tpu_custom_call.1} parent=51 // pred_region
          %s2480 = sand.u32 %s141, 1
          %s2481 = scalar_lea.sflag [#allocation4], %s2480
          %s2482 = sand.u32 %s141, 1
          %s2483 = smul.addr %s2482, 4
          %s2484 = scalar_lea.vmem [#allocation5], %s2483
          %2486 = dma.done %s2481, 64
        $region56: #{tpu_custom_call.1} parent=51 // pred_fallthru
          _
      $region52: #{tpu_custom_call.1} parent=5 // pred_fallthru
        _
    $region6: #{tpu_custom_call.1} parent=1 // loop_footer
      %s21 = sadd.s32 1, %s17
    $region7: #{tpu_custom_call.1} parent=1 // loop_footer_branch
      %16 = sbr.rel target = $region3
    $region8: #{tpu_custom_call.1} parent=1 // loop_exit
      _
    %2487 = vsyncpa [#allocation3], 1
    %s2488 = scalar_lea.sflag [#allocation3], 1
    %2489 = vsyncpa %s2488, 1
    %2490 = vsyncpa [#allocation4], 1
    %s2491 = scalar_lea.sflag [#allocation4], 1
    %2492 = vsyncpa %s2491, 1

</llo_original>
